<compile_context>
chip_gen: v6e
topology: v6e:2x2x1
jax: 0.10.0
libtpu: 0.0.40
codegen_flags: <defaults>
</compile_context>

<pallas_src>
import jax
import jax.numpy as jnp
from jax.experimental import pallas as pl
from jax.experimental.pallas import tpu as pltpu


def _make_textcnn_kernel(tb, L, E, max_k, pool_k):
    """Pallas kernel closed over the static config."""

    def kernel(tok_ref, emb_ref, w_ref, b_ref, fw_ref, fcb_ref, out_ref, x_ref):
        i = pl.program_id(0)

        # ---- embedding: row gather from the VMEM table, driven by SMEM tokens.
        # tok_ref is the full flat (B*L,) token vector in SMEM (scalar
        # prefetch); each copy is a (1, E) VMEM->VMEM vector move.
        for b in range(tb):                      # static unroll (tb*L tiny rows)
            for l in range(L):
                t = tok_ref[(i * tb + b) * L + l]
                x_ref[b, pl.ds(l, 1), :] = emb_ref[pl.ds(t, 1), :]

        x = x_ref[...].astype(w_ref.dtype)       # (tb, L, E), cast to bf16 once

        # ---- convs: accumulate over kernel rows r (no im2col concat) --------
        npad = w_ref.shape[1]
        acc = jnp.zeros((tb, pool_k, npad), jnp.float32)
        for r in range(max_k):                   # static unroll, 8-aligned W rows
            acc = acc + jax.lax.dot_general(
                x[:, r:r + pool_k, :],           # (tb, pool_k, E)
                w_ref[r * E:(r + 1) * E, :],     # (E, npad)
                dimension_numbers=(((2,), (0,)), ((), ())),
                preferred_element_type=jnp.float32)   # (tb, pool_k, npad) f32

        # ---- bias + ReLU + MaxPool1d(pool_k): single window over pool_k rows -
        h = jnp.maximum(acc + b_ref[...], 0.0)   # (tb, pool_k, npad)
        feat = jnp.max(h, axis=1)                # (tb, npad)

        # ---- final FC (out_features = 1), written lane-dense as (1, tb) ------
        logits = jax.lax.dot_general(
            fw_ref[...], feat,                   # (1, npad) x (tb, npad)^T
            dimension_numbers=(((1,), (1,)), ((), ())),
            preferred_element_type=jnp.float32)  # (1, tb)
        out_ref[...] = (logits + fcb_ref[...]).astype(out_ref.dtype)

    return kernel


def textcnn_forward_pallas(tokens, emb_table, conv_params, fc_w, fc_b,
                           kernel_sizes, *, c_pad=128, batch_tile=None,
                           conv_dtype=jnp.bfloat16):
    """Fused TextCNN forward.

    tokens:      (B, L) int32, values in [0, vocab)
    emb_table:   (vocab, E) f32
    conv_params: list of (w_k (k, E, C), b_k (1, C)) per kernel size
                 (w_k[r, e, c] == torch Conv2d weight[c, 0, r, e])
    fc_w:        (n_k*C, 1) f32   (torch Linear weight transposed)
    fc_b:        (1, 1) f32
    """
    B, L = tokens.shape
    V, E = emb_table.shape
    n_k = len(kernel_sizes)
    max_k = max(kernel_sizes)
    pool_k = L - max_k + 1
    C = conv_params[0][0].shape[-1]
    npad = n_k * c_pad                       # 3 * 128 = 384, lane-aligned N

    # ---- pack conv + fc params into lane-dense fused operands (done once) ---
    wf = jnp.zeros((max_k * E, npad), jnp.float32)
    bf = jnp.zeros((1, npad), jnp.float32)
    fw = jnp.zeros((1, npad), jnp.float32)
    for j, ((w, b), k) in enumerate(zip(conv_params, kernel_sizes)):
        wf = wf.at[:k * E, j * c_pad:j * c_pad + C].set(w.reshape(k * E, C))
        bf = bf.at[:, j * c_pad:j * c_pad + C].set(b)
        fw = fw.at[:, j * c_pad:j * c_pad + C].set(fc_w[j * C:(j + 1) * C, 0][None, :])
    wf = wf.astype(conv_dtype)               # bf16 MXU operand (f32 accumulate)
    fb = fc_b.reshape(1, 1).astype(jnp.float32)

    # Tokens: flat 1-D int32, scalar-prefetched into SMEM (no VMEM token DMA).
    tok = tokens.astype(jnp.int32).reshape(B * L)

    # Batch tile: small (multiple of 8 once B >= 8) so B // tb gives several
    # grid steps -> both v7x TensorCores get work and the pipeline can overlap.
    tb = batch_tile if batch_tile is not None else min(B, 8)
    assert B % tb == 0, "batch must be divisible by the batch tile"
    grid = (B // tb,)

    kernel = _make_textcnn_kernel(tb, L, E, max_k, pool_k)

    out_rows = pl.pallas_call(
        kernel,
        out_shape=jax.ShapeDtypeStruct((B // tb, tb), jnp.float32),
        grid_spec=pltpu.PrefetchScalarGridSpec(
            num_scalar_prefetch=1,            # tokens -> SMEM
            grid=grid,
            in_specs=[
                pl.BlockSpec((V, E), lambda i, tok: (0, 0)),             # emb table
                pl.BlockSpec((max_k * E, npad), lambda i, tok: (0, 0)),  # fused conv W
                pl.BlockSpec((1, npad), lambda i, tok: (0, 0)),          # fused conv b
                pl.BlockSpec((1, npad), lambda i, tok: (0, 0)),          # fused fc W
                pl.BlockSpec((1, 1), lambda i, tok: (0, 0)),             # fc b
            ],
            out_specs=pl.BlockSpec((1, tb), lambda i, tok: (i, 0)),      # lane-dense
            scratch_shapes=[pltpu.VMEM((tb, L, E), jnp.float32)],        # gathered x
        ),
        compiler_params=pltpu.CompilerParams(
            dimension_semantics=("parallel",),
            vmem_limit_bytes=32 * 1024 * 1024),
    )(tok, emb_table.astype(jnp.float32), wf, bf, fw, fb)

    return out_rows.reshape(B, 1)


def textcnn_reference(tokens, emb_table, conv_params, fc_w, fc_b, kernel_sizes):
    """Pure-JAX f32 reference mirroring the PyTorch forward (unfused, unpadded)."""
    B, L = tokens.shape
    max_k = max(kernel_sizes)
    pool_k = L - max_k + 1
    x = emb_table[tokens]                                     # (B, L, E)
    feats = []
    for (w, b), k in zip(conv_params, kernel_sizes):
        l_out = L - k + 1
        acc = jnp.zeros((B, l_out, w.shape[-1]), jnp.float32)
        for r in range(k):
            acc = acc + jnp.einsum('ble,ec->blc', x[:, r:r + l_out, :], w[r])
        acc = jax.nn.relu(acc + b[None, :, :])
        feats.append(jnp.max(acc[:, :pool_k, :], axis=1))     # MaxPool1d, one window
    feat = jnp.concatenate(feats, axis=1)
    return feat @ fc_w + fc_b


if __name__ == "__main__":
    # Module config (small shapes consistent with the nn.Module).
    embedding_dim = 32
    kernel_sizes = [3, 4, 5]
    max_length = 8          # seq length == vocab size of the Embedding
    n_filters = 100
    batch = 2

    key = jax.random.PRNGKey(0)
    k_emb, k_tok, k_fc, k_fcb, *k_convs = jax.random.split(
        key, 4 + 2 * len(kernel_sizes))

    # Deterministic parameter init (shapes match the nn.Module).
    emb_table = jax.random.normal(k_emb, (max_length, embedding_dim), jnp.float32)

    conv_params = []
    for i, k in enumerate(kernel_sizes):
        kw, kb = k_convs[2 * i], k_convs[2 * i + 1]
        fan_in = 1 * k * embedding_dim
        bound = 1.0 / (fan_in ** 0.5)
        # stored as (k, E, C): W[r, e, c] == torch Conv2d weight[c, 0, r, e]
        w = jax.random.uniform(kw, (k, embedding_dim, n_filters), jnp.float32,
                               -bound, bound)
        b = jax.random.uniform(kb, (1, n_filters), jnp.float32, -bound, bound)
        conv_params.append((w, b))

    fc_in = len(kernel_sizes) * n_filters
    fc_bound = 1.0 / (fc_in ** 0.5)
    fc_w = jax.random.uniform(k_fc, (fc_in, 1), jnp.float32, -fc_bound, fc_bound)
    fc_b = jax.random.uniform(k_fcb, (1, 1), jnp.float32, -fc_bound, fc_bound)

    # Integer token input (gather happens inside the kernel, tokens via SMEM).
    tokens = jax.random.randint(k_tok, (batch, max_length), 0, max_length)

    out = textcnn_forward_pallas(tokens, emb_table, conv_params, fc_w, fc_b,
                                 kernel_sizes)
    out = jax.block_until_ready(out)

    ref = textcnn_reference(tokens, emb_table, conv_params, fc_w, fc_b,
                            kernel_sizes)
    assert out.shape == (batch, 1)
    # bf16 MXU inputs (f32 accumulate) per perf review: relax the f32 tolerance.
    assert jnp.allclose(out, ref, atol=2e-2, rtol=2e-2)

    print("KERNEL_OK")
</pallas_src>

<mosaic_0001>
module attributes {stable_mosaic.version = 11 : i64} {
  func.func @kernel(%arg0: i32, %arg1: memref<16xi32, #tpu.memory_space<smem>>, %arg2: memref<8x32xf32, #tpu.memory_space<vmem>>, %arg3: memref<160x384xbf16, #tpu.memory_space<vmem>>, %arg4: memref<1x384xf32, #tpu.memory_space<vmem>>, %arg5: memref<1x384xf32, #tpu.memory_space<vmem>>, %arg6: memref<1x1xf32, #tpu.memory_space<vmem>>, %arg7: memref<1x2xf32, #tpu.memory_space<vmem>>, %arg8: memref<2x8x32xf32, #tpu.memory_space<vmem>>) attributes {dimension_semantics = [#tpu.dimension_semantics<parallel>], iteration_bounds = array<i64: 1>, scalar_prefetch = 1 : i64, scratch_operands = 1 : i64, tpu.core_type = #tpu.core_type<tc>, window_params = [{pipeline_mode = #tpu.pipeline_mode<synchronous>, transform_indices = @transform_0, window_bounds = array<i64: 8, 32>}, {pipeline_mode = #tpu.pipeline_mode<synchronous>, transform_indices = @transform_1, window_bounds = array<i64: 160, 384>}, {pipeline_mode = #tpu.pipeline_mode<synchronous>, transform_indices = @transform_2, window_bounds = array<i64: 1, 384>}, {pipeline_mode = #tpu.pipeline_mode<synchronous>, transform_indices = @transform_3, window_bounds = array<i64: 1, 384>}, {pipeline_mode = #tpu.pipeline_mode<synchronous>, transform_indices = @transform_4, window_bounds = array<i64: 1, 1>}, {transform_indices = @transform_5, window_bounds = array<i64: 1, 2>}]} {
    %c2_i32 = arith.constant 2 : i32
    %0 = arith.muli %arg0, %c2_i32 : i32
    %c0_i32 = arith.constant 0 : i32
    %1 = arith.addi %0, %c0_i32 : i32
    %c8_i32 = arith.constant 8 : i32
    %2 = arith.muli %1, %c8_i32 : i32
    %c0_i32_0 = arith.constant 0 : i32
    %3 = arith.addi %2, %c0_i32_0 : i32
    %4 = arith.index_cast %3 : i32 to index
    %5 = memref.load %arg1[%4] : memref<16xi32, #tpu.memory_space<smem>>
    %6 = arith.index_cast %5 : i32 to index
    %c0 = arith.constant 0 : index
    %7 = vector.load %arg2[%6, %c0] : memref<8x32xf32, #tpu.memory_space<vmem>>, vector<1x32xf32>
    %c0_1 = arith.constant 0 : index
    %c0_2 = arith.constant 0 : index
    %c0_3 = arith.constant 0 : index
    %8 = vector.load %arg8[%c0_1, %c0_2, %c0_3] : memref<2x8x32xf32, #tpu.memory_space<vmem>>, vector<1x1x32xf32>
    %9 = vector.shape_cast %8 : vector<1x1x32xf32> to vector<1x32xf32>
    %10 = vector.shape_cast %7 : vector<1x32xf32> to vector<1x1x32xf32>
    tpu.vector_store %arg8[%c0_1, %c0_2, %c0_3], %10 {strides = array<i32>} : memref<2x8x32xf32, #tpu.memory_space<vmem>>, vector<1x1x32xf32>,
    %c2_i32_4 = arith.constant 2 : i32
    %11 = arith.muli %arg0, %c2_i32_4 : i32
    %c0_i32_5 = arith.constant 0 : i32
    %12 = arith.addi %11, %c0_i32_5 : i32
    %c8_i32_6 = arith.constant 8 : i32
    %13 = arith.muli %12, %c8_i32_6 : i32
    %c1_i32 = arith.constant 1 : i32
    %14 = arith.addi %13, %c1_i32 : i32
    %15 = arith.index_cast %14 : i32 to index
    %16 = memref.load %arg1[%15] : memref<16xi32, #tpu.memory_space<smem>>
    %17 = arith.index_cast %16 : i32 to index
    %c0_7 = arith.constant 0 : index
    %18 = vector.load %arg2[%17, %c0_7] : memref<8x32xf32, #tpu.memory_space<vmem>>, vector<1x32xf32>
    %c0_8 = arith.constant 0 : index
    %c1 = arith.constant 1 : index
    %c0_9 = arith.constant 0 : index
    %19 = vector.load %arg8[%c0_8, %c1, %c0_9] : memref<2x8x32xf32, #tpu.memory_space<vmem>>, vector<1x1x32xf32>
    %20 = vector.shape_cast %19 : vector<1x1x32xf32> to vector<1x32xf32>
    %21 = vector.shape_cast %18 : vector<1x32xf32> to vector<1x1x32xf32>
    tpu.vector_store %arg8[%c0_8, %c1, %c0_9], %21 {strides = array<i32>} : memref<2x8x32xf32, #tpu.memory_space<vmem>>, vector<1x1x32xf32>,
    %c2_i32_10 = arith.constant 2 : i32
    %22 = arith.muli %arg0, %c2_i32_10 : i32
    %c0_i32_11 = arith.constant 0 : i32
    %23 = arith.addi %22, %c0_i32_11 : i32
    %c8_i32_12 = arith.constant 8 : i32
    %24 = arith.muli %23, %c8_i32_12 : i32
    %c2_i32_13 = arith.constant 2 : i32
    %25 = arith.addi %24, %c2_i32_13 : i32
    %26 = arith.index_cast %25 : i32 to index
    %27 = memref.load %arg1[%26] : memref<16xi32, #tpu.memory_space<smem>>
    %28 = arith.index_cast %27 : i32 to index
    %c0_14 = arith.constant 0 : index
    %29 = vector.load %arg2[%28, %c0_14] : memref<8x32xf32, #tpu.memory_space<vmem>>, vector<1x32xf32>
    %c0_15 = arith.constant 0 : index
    %c2 = arith.constant 2 : index
    %c0_16 = arith.constant 0 : index
    %30 = vector.load %arg8[%c0_15, %c2, %c0_16] : memref<2x8x32xf32, #tpu.memory_space<vmem>>, vector<1x1x32xf32>
    %31 = vector.shape_cast %30 : vector<1x1x32xf32> to vector<1x32xf32>
    %32 = vector.shape_cast %29 : vector<1x32xf32> to vector<1x1x32xf32>
    tpu.vector_store %arg8[%c0_15, %c2, %c0_16], %32 {strides = array<i32>} : memref<2x8x32xf32, #tpu.memory_space<vmem>>, vector<1x1x32xf32>,
    %c2_i32_17 = arith.constant 2 : i32
    %33 = arith.muli %arg0, %c2_i32_17 : i32
    %c0_i32_18 = arith.constant 0 : i32
    %34 = arith.addi %33, %c0_i32_18 : i32
    %c8_i32_19 = arith.constant 8 : i32
    %35 = arith.muli %34, %c8_i32_19 : i32
    %c3_i32 = arith.constant 3 : i32
    %36 = arith.addi %35, %c3_i32 : i32
    %37 = arith.index_cast %36 : i32 to index
    %38 = memref.load %arg1[%37] : memref<16xi32, #tpu.memory_space<smem>>
    %39 = arith.index_cast %38 : i32 to index
    %c0_20 = arith.constant 0 : index
    %40 = vector.load %arg2[%39, %c0_20] : memref<8x32xf32, #tpu.memory_space<vmem>>, vector<1x32xf32>
    %c0_21 = arith.constant 0 : index
    %c3 = arith.constant 3 : index
    %c0_22 = arith.constant 0 : index
    %41 = vector.load %arg8[%c0_21, %c3, %c0_22] : memref<2x8x32xf32, #tpu.memory_space<vmem>>, vector<1x1x32xf32>
    %42 = vector.shape_cast %41 : vector<1x1x32xf32> to vector<1x32xf32>
    %43 = vector.shape_cast %40 : vector<1x32xf32> to vector<1x1x32xf32>
    tpu.vector_store %arg8[%c0_21, %c3, %c0_22], %43 {strides = array<i32>} : memref<2x8x32xf32, #tpu.memory_space<vmem>>, vector<1x1x32xf32>,
    %c2_i32_23 = arith.constant 2 : i32
    %44 = arith.muli %arg0, %c2_i32_23 : i32
    %c0_i32_24 = arith.constant 0 : i32
    %45 = arith.addi %44, %c0_i32_24 : i32
    %c8_i32_25 = arith.constant 8 : i32
    %46 = arith.muli %45, %c8_i32_25 : i32
    %c4_i32 = arith.constant 4 : i32
    %47 = arith.addi %46, %c4_i32 : i32
    %48 = arith.index_cast %47 : i32 to index
    %49 = memref.load %arg1[%48] : memref<16xi32, #tpu.memory_space<smem>>
    %50 = arith.index_cast %49 : i32 to index
    %c0_26 = arith.constant 0 : index
    %51 = vector.load %arg2[%50, %c0_26] : memref<8x32xf32, #tpu.memory_space<vmem>>, vector<1x32xf32>
    %c0_27 = arith.constant 0 : index
    %c4 = arith.constant 4 : index
    %c0_28 = arith.constant 0 : index
    %52 = vector.load %arg8[%c0_27, %c4, %c0_28] : memref<2x8x32xf32, #tpu.memory_space<vmem>>, vector<1x1x32xf32>
    %53 = vector.shape_cast %52 : vector<1x1x32xf32> to vector<1x32xf32>
    %54 = vector.shape_cast %51 : vector<1x32xf32> to vector<1x1x32xf32>
    tpu.vector_store %arg8[%c0_27, %c4, %c0_28], %54 {strides = array<i32>} : memref<2x8x32xf32, #tpu.memory_space<vmem>>, vector<1x1x32xf32>,
    %c2_i32_29 = arith.constant 2 : i32
    %55 = arith.muli %arg0, %c2_i32_29 : i32
    %c0_i32_30 = arith.constant 0 : i32
    %56 = arith.addi %55, %c0_i32_30 : i32
    %c8_i32_31 = arith.constant 8 : i32
    %57 = arith.muli %56, %c8_i32_31 : i32
    %c5_i32 = arith.constant 5 : i32
    %58 = arith.addi %57, %c5_i32 : i32
    %59 = arith.index_cast %58 : i32 to index
    %60 = memref.load %arg1[%59] : memref<16xi32, #tpu.memory_space<smem>>
    %61 = arith.index_cast %60 : i32 to index
    %c0_32 = arith.constant 0 : index
    %62 = vector.load %arg2[%61, %c0_32] : memref<8x32xf32, #tpu.memory_space<vmem>>, vector<1x32xf32>
    %c0_33 = arith.constant 0 : index
    %c5 = arith.constant 5 : index
    %c0_34 = arith.constant 0 : index
    %63 = vector.load %arg8[%c0_33, %c5, %c0_34] : memref<2x8x32xf32, #tpu.memory_space<vmem>>, vector<1x1x32xf32>
    %64 = vector.shape_cast %63 : vector<1x1x32xf32> to vector<1x32xf32>
    %65 = vector.shape_cast %62 : vector<1x32xf32> to vector<1x1x32xf32>
    tpu.vector_store %arg8[%c0_33, %c5, %c0_34], %65 {strides = array<i32>} : memref<2x8x32xf32, #tpu.memory_space<vmem>>, vector<1x1x32xf32>,
    %c2_i32_35 = arith.constant 2 : i32
    %66 = arith.muli %arg0, %c2_i32_35 : i32
    %c0_i32_36 = arith.constant 0 : i32
    %67 = arith.addi %66, %c0_i32_36 : i32
    %c8_i32_37 = arith.constant 8 : i32
    %68 = arith.muli %67, %c8_i32_37 : i32
    %c6_i32 = arith.constant 6 : i32
    %69 = arith.addi %68, %c6_i32 : i32
    %70 = arith.index_cast %69 : i32 to index
    %71 = memref.load %arg1[%70] : memref<16xi32, #tpu.memory_space<smem>>
    %72 = arith.index_cast %71 : i32 to index
    %c0_38 = arith.constant 0 : index
    %73 = vector.load %arg2[%72, %c0_38] : memref<8x32xf32, #tpu.memory_space<vmem>>, vector<1x32xf32>
    %c0_39 = arith.constant 0 : index
    %c6 = arith.constant 6 : index
    %c0_40 = arith.constant 0 : index
    %74 = vector.load %arg8[%c0_39, %c6, %c0_40] : memref<2x8x32xf32, #tpu.memory_space<vmem>>, vector<1x1x32xf32>
    %75 = vector.shape_cast %74 : vector<1x1x32xf32> to vector<1x32xf32>
    %76 = vector.shape_cast %73 : vector<1x32xf32> to vector<1x1x32xf32>
    tpu.vector_store %arg8[%c0_39, %c6, %c0_40], %76 {strides = array<i32>} : memref<2x8x32xf32, #tpu.memory_space<vmem>>, vector<1x1x32xf32>,
    %c2_i32_41 = arith.constant 2 : i32
    %77 = arith.muli %arg0, %c2_i32_41 : i32
    %c0_i32_42 = arith.constant 0 : i32
    %78 = arith.addi %77, %c0_i32_42 : i32
    %c8_i32_43 = arith.constant 8 : i32
    %79 = arith.muli %78, %c8_i32_43 : i32
    %c7_i32 = arith.constant 7 : i32
    %80 = arith.addi %79, %c7_i32 : i32
    %81 = arith.index_cast %80 : i32 to index
    %82 = memref.load %arg1[%81] : memref<16xi32, #tpu.memory_space<smem>>
    %83 = arith.index_cast %82 : i32 to index
    %c0_44 = arith.constant 0 : index
    %84 = vector.load %arg2[%83, %c0_44] : memref<8x32xf32, #tpu.memory_space<vmem>>, vector<1x32xf32>
    %c0_45 = arith.constant 0 : index
    %c7 = arith.constant 7 : index
    %c0_46 = arith.constant 0 : index
    %85 = vector.load %arg8[%c0_45, %c7, %c0_46] : memref<2x8x32xf32, #tpu.memory_space<vmem>>, vector<1x1x32xf32>
    %86 = vector.shape_cast %85 : vector<1x1x32xf32> to vector<1x32xf32>
    %87 = vector.shape_cast %84 : vector<1x32xf32> to vector<1x1x32xf32>
    tpu.vector_store %arg8[%c0_45, %c7, %c0_46], %87 {strides = array<i32>} : memref<2x8x32xf32, #tpu.memory_space<vmem>>, vector<1x1x32xf32>,
    %c2_i32_47 = arith.constant 2 : i32
    %88 = arith.muli %arg0, %c2_i32_47 : i32
    %c1_i32_48 = arith.constant 1 : i32
    %89 = arith.addi %88, %c1_i32_48 : i32
    %c8_i32_49 = arith.constant 8 : i32
    %90 = arith.muli %89, %c8_i32_49 : i32
    %c0_i32_50 = arith.constant 0 : i32
    %91 = arith.addi %90, %c0_i32_50 : i32
    %92 = arith.index_cast %91 : i32 to index
    %93 = memref.load %arg1[%92] : memref<16xi32, #tpu.memory_space<smem>>
    %94 = arith.index_cast %93 : i32 to index
    %c0_51 = arith.constant 0 : index
    %95 = vector.load %arg2[%94, %c0_51] : memref<8x32xf32, #tpu.memory_space<vmem>>, vector<1x32xf32>
    %c1_52 = arith.constant 1 : index
    %c0_53 = arith.constant 0 : index
    %c0_54 = arith.constant 0 : index
    %96 = vector.load %arg8[%c1_52, %c0_53, %c0_54] : memref<2x8x32xf32, #tpu.memory_space<vmem>>, vector<1x1x32xf32>
    %97 = vector.shape_cast %96 : vector<1x1x32xf32> to vector<1x32xf32>
    %98 = vector.shape_cast %95 : vector<1x32xf32> to vector<1x1x32xf32>
    tpu.vector_store %arg8[%c1_52, %c0_53, %c0_54], %98 {strides = array<i32>} : memref<2x8x32xf32, #tpu.memory_space<vmem>>, vector<1x1x32xf32>,
    %c2_i32_55 = arith.constant 2 : i32
    %99 = arith.muli %arg0, %c2_i32_55 : i32
    %c1_i32_56 = arith.constant 1 : i32
    %100 = arith.addi %99, %c1_i32_56 : i32
    %c8_i32_57 = arith.constant 8 : i32
    %101 = arith.muli %100, %c8_i32_57 : i32
    %c1_i32_58 = arith.constant 1 : i32
    %102 = arith.addi %101, %c1_i32_58 : i32
    %103 = arith.index_cast %102 : i32 to index
    %104 = memref.load %arg1[%103] : memref<16xi32, #tpu.memory_space<smem>>
    %105 = arith.index_cast %104 : i32 to index
    %c0_59 = arith.constant 0 : index
    %106 = vector.load %arg2[%105, %c0_59] : memref<8x32xf32, #tpu.memory_space<vmem>>, vector<1x32xf32>
    %c1_60 = arith.constant 1 : index
    %c1_61 = arith.constant 1 : index
    %c0_62 = arith.constant 0 : index
    %107 = vector.load %arg8[%c1_60, %c1_61, %c0_62] : memref<2x8x32xf32, #tpu.memory_space<vmem>>, vector<1x1x32xf32>
    %108 = vector.shape_cast %107 : vector<1x1x32xf32> to vector<1x32xf32>
    %109 = vector.shape_cast %106 : vector<1x32xf32> to vector<1x1x32xf32>
    tpu.vector_store %arg8[%c1_60, %c1_61, %c0_62], %109 {strides = array<i32>} : memref<2x8x32xf32, #tpu.memory_space<vmem>>, vector<1x1x32xf32>,
    %c2_i32_63 = arith.constant 2 : i32
    %110 = arith.muli %arg0, %c2_i32_63 : i32
    %c1_i32_64 = arith.constant 1 : i32
    %111 = arith.addi %110, %c1_i32_64 : i32
    %c8_i32_65 = arith.constant 8 : i32
    %112 = arith.muli %111, %c8_i32_65 : i32
    %c2_i32_66 = arith.constant 2 : i32
    %113 = arith.addi %112, %c2_i32_66 : i32
    %114 = arith.index_cast %113 : i32 to index
    %115 = memref.load %arg1[%114] : memref<16xi32, #tpu.memory_space<smem>>
    %116 = arith.index_cast %115 : i32 to index
    %c0_67 = arith.constant 0 : index
    %117 = vector.load %arg2[%116, %c0_67] : memref<8x32xf32, #tpu.memory_space<vmem>>, vector<1x32xf32>
    %c1_68 = arith.constant 1 : index
    %c2_69 = arith.constant 2 : index
    %c0_70 = arith.constant 0 : index
    %118 = vector.load %arg8[%c1_68, %c2_69, %c0_70] : memref<2x8x32xf32, #tpu.memory_space<vmem>>, vector<1x1x32xf32>
    %119 = vector.shape_cast %118 : vector<1x1x32xf32> to vector<1x32xf32>
    %120 = vector.shape_cast %117 : vector<1x32xf32> to vector<1x1x32xf32>
    tpu.vector_store %arg8[%c1_68, %c2_69, %c0_70], %120 {strides = array<i32>} : memref<2x8x32xf32, #tpu.memory_space<vmem>>, vector<1x1x32xf32>,
    %c2_i32_71 = arith.constant 2 : i32
    %121 = arith.muli %arg0, %c2_i32_71 : i32
    %c1_i32_72 = arith.constant 1 : i32
    %122 = arith.addi %121, %c1_i32_72 : i32
    %c8_i32_73 = arith.constant 8 : i32
    %123 = arith.muli %122, %c8_i32_73 : i32
    %c3_i32_74 = arith.constant 3 : i32
    %124 = arith.addi %123, %c3_i32_74 : i32
    %125 = arith.index_cast %124 : i32 to index
    %126 = memref.load %arg1[%125] : memref<16xi32, #tpu.memory_space<smem>>
    %127 = arith.index_cast %126 : i32 to index
    %c0_75 = arith.constant 0 : index
    %128 = vector.load %arg2[%127, %c0_75] : memref<8x32xf32, #tpu.memory_space<vmem>>, vector<1x32xf32>
    %c1_76 = arith.constant 1 : index
    %c3_77 = arith.constant 3 : index
    %c0_78 = arith.constant 0 : index
    %129 = vector.load %arg8[%c1_76, %c3_77, %c0_78] : memref<2x8x32xf32, #tpu.memory_space<vmem>>, vector<1x1x32xf32>
    %130 = vector.shape_cast %129 : vector<1x1x32xf32> to vector<1x32xf32>
    %131 = vector.shape_cast %128 : vector<1x32xf32> to vector<1x1x32xf32>
    tpu.vector_store %arg8[%c1_76, %c3_77, %c0_78], %131 {strides = array<i32>} : memref<2x8x32xf32, #tpu.memory_space<vmem>>, vector<1x1x32xf32>,
    %c2_i32_79 = arith.constant 2 : i32
    %132 = arith.muli %arg0, %c2_i32_79 : i32
    %c1_i32_80 = arith.constant 1 : i32
    %133 = arith.addi %132, %c1_i32_80 : i32
    %c8_i32_81 = arith.constant 8 : i32
    %134 = arith.muli %133, %c8_i32_81 : i32
    %c4_i32_82 = arith.constant 4 : i32
    %135 = arith.addi %134, %c4_i32_82 : i32
    %136 = arith.index_cast %135 : i32 to index
    %137 = memref.load %arg1[%136] : memref<16xi32, #tpu.memory_space<smem>>
    %138 = arith.index_cast %137 : i32 to index
    %c0_83 = arith.constant 0 : index
    %139 = vector.load %arg2[%138, %c0_83] : memref<8x32xf32, #tpu.memory_space<vmem>>, vector<1x32xf32>
    %c1_84 = arith.constant 1 : index
    %c4_85 = arith.constant 4 : index
    %c0_86 = arith.constant 0 : index
    %140 = vector.load %arg8[%c1_84, %c4_85, %c0_86] : memref<2x8x32xf32, #tpu.memory_space<vmem>>, vector<1x1x32xf32>
    %141 = vector.shape_cast %140 : vector<1x1x32xf32> to vector<1x32xf32>
    %142 = vector.shape_cast %139 : vector<1x32xf32> to vector<1x1x32xf32>
    tpu.vector_store %arg8[%c1_84, %c4_85, %c0_86], %142 {strides = array<i32>} : memref<2x8x32xf32, #tpu.memory_space<vmem>>, vector<1x1x32xf32>,
    %c2_i32_87 = arith.constant 2 : i32
    %143 = arith.muli %arg0, %c2_i32_87 : i32
    %c1_i32_88 = arith.constant 1 : i32
    %144 = arith.addi %143, %c1_i32_88 : i32
    %c8_i32_89 = arith.constant 8 : i32
    %145 = arith.muli %144, %c8_i32_89 : i32
    %c5_i32_90 = arith.constant 5 : i32
    %146 = arith.addi %145, %c5_i32_90 : i32
    %147 = arith.index_cast %146 : i32 to index
    %148 = memref.load %arg1[%147] : memref<16xi32, #tpu.memory_space<smem>>
    %149 = arith.index_cast %148 : i32 to index
    %c0_91 = arith.constant 0 : index
    %150 = vector.load %arg2[%149, %c0_91] : memref<8x32xf32, #tpu.memory_space<vmem>>, vector<1x32xf32>
    %c1_92 = arith.constant 1 : index
    %c5_93 = arith.constant 5 : index
    %c0_94 = arith.constant 0 : index
    %151 = vector.load %arg8[%c1_92, %c5_93, %c0_94] : memref<2x8x32xf32, #tpu.memory_space<vmem>>, vector<1x1x32xf32>
    %152 = vector.shape_cast %151 : vector<1x1x32xf32> to vector<1x32xf32>
    %153 = vector.shape_cast %150 : vector<1x32xf32> to vector<1x1x32xf32>
    tpu.vector_store %arg8[%c1_92, %c5_93, %c0_94], %153 {strides = array<i32>} : memref<2x8x32xf32, #tpu.memory_space<vmem>>, vector<1x1x32xf32>,
    %c2_i32_95 = arith.constant 2 : i32
    %154 = arith.muli %arg0, %c2_i32_95 : i32
    %c1_i32_96 = arith.constant 1 : i32
    %155 = arith.addi %154, %c1_i32_96 : i32
    %c8_i32_97 = arith.constant 8 : i32
    %156 = arith.muli %155, %c8_i32_97 : i32
    %c6_i32_98 = arith.constant 6 : i32
    %157 = arith.addi %156, %c6_i32_98 : i32
    %158 = arith.index_cast %157 : i32 to index
    %159 = memref.load %arg1[%158] : memref<16xi32, #tpu.memory_space<smem>>
    %160 = arith.index_cast %159 : i32 to index
    %c0_99 = arith.constant 0 : index
    %161 = vector.load %arg2[%160, %c0_99] : memref<8x32xf32, #tpu.memory_space<vmem>>, vector<1x32xf32>
    %c1_100 = arith.constant 1 : index
    %c6_101 = arith.constant 6 : index
    %c0_102 = arith.constant 0 : index
    %162 = vector.load %arg8[%c1_100, %c6_101, %c0_102] : memref<2x8x32xf32, #tpu.memory_space<vmem>>, vector<1x1x32xf32>
    %163 = vector.shape_cast %162 : vector<1x1x32xf32> to vector<1x32xf32>
    %164 = vector.shape_cast %161 : vector<1x32xf32> to vector<1x1x32xf32>
    tpu.vector_store %arg8[%c1_100, %c6_101, %c0_102], %164 {strides = array<i32>} : memref<2x8x32xf32, #tpu.memory_space<vmem>>, vector<1x1x32xf32>,
    %c2_i32_103 = arith.constant 2 : i32
    %165 = arith.muli %arg0, %c2_i32_103 : i32
    %c1_i32_104 = arith.constant 1 : i32
    %166 = arith.addi %165, %c1_i32_104 : i32
    %c8_i32_105 = arith.constant 8 : i32
    %167 = arith.muli %166, %c8_i32_105 : i32
    %c7_i32_106 = arith.constant 7 : i32
    %168 = arith.addi %167, %c7_i32_106 : i32
    %169 = arith.index_cast %168 : i32 to index
    %170 = memref.load %arg1[%169] : memref<16xi32, #tpu.memory_space<smem>>
    %171 = arith.index_cast %170 : i32 to index
    %c0_107 = arith.constant 0 : index
    %172 = vector.load %arg2[%171, %c0_107] : memref<8x32xf32, #tpu.memory_space<vmem>>, vector<1x32xf32>
    %c1_108 = arith.constant 1 : index
    %c7_109 = arith.constant 7 : index
    %c0_110 = arith.constant 0 : index
    %173 = vector.load %arg8[%c1_108, %c7_109, %c0_110] : memref<2x8x32xf32, #tpu.memory_space<vmem>>, vector<1x1x32xf32>
    %174 = vector.shape_cast %173 : vector<1x1x32xf32> to vector<1x32xf32>
    %175 = vector.shape_cast %172 : vector<1x32xf32> to vector<1x1x32xf32>
    tpu.vector_store %arg8[%c1_108, %c7_109, %c0_110], %175 {strides = array<i32>} : memref<2x8x32xf32, #tpu.memory_space<vmem>>, vector<1x1x32xf32>,
    %c0_111 = arith.constant 0 : index
    %c0_112 = arith.constant 0 : index
    %c0_113 = arith.constant 0 : index
    %176 = vector.load %arg8[%c0_111, %c0_112, %c0_113] : memref<2x8x32xf32, #tpu.memory_space<vmem>>, vector<2x8x32xf32>
    %177 = arith.truncf %176 : vector<2x8x32xf32> to vector<2x8x32xbf16>
    %cst = arith.constant 0.000000e+00 : f32
    %178 = vector.broadcast %cst : f32 to vector<2x4x384xf32>
    %179 = vector.extract_strided_slice %177 {offsets = [0, 0, 0], sizes = [2, 4, 32], strides = [1, 1, 1]} : vector<2x8x32xbf16> to vector<2x4x32xbf16>
    %c0_114 = arith.constant 0 : index
    %c0_115 = arith.constant 0 : index
    %180 = vector.load %arg3[%c0_114, %c0_115] : memref<160x384xbf16, #tpu.memory_space<vmem>>, vector<32x384xbf16>
    %cst_116 = arith.constant dense<0.000000e+00> : vector<2x4x384xf32>
    %181 = tpu.matmul %179, %180, %cst_116 {dimension_numbers = #tpu.dot_dimension_numbers<[2], [0], [0, 1], [1], [0, 0, 0, 1, 1, 1], [], []>} : vector<2x4x32xbf16>, vector<32x384xbf16>, vector<2x4x384xf32> -> vector<2x4x384xf32>
    %182 = arith.addf %178, %181 : vector<2x4x384xf32>
    %183 = vector.extract_strided_slice %177 {offsets = [0, 1, 0], sizes = [2, 4, 32], strides = [1, 1, 1]} : vector<2x8x32xbf16> to vector<2x4x32xbf16>
    %c32 = arith.constant 32 : index
    %c0_117 = arith.constant 0 : index
    %184 = vector.load %arg3[%c32, %c0_117] : memref<160x384xbf16, #tpu.memory_space<vmem>>, vector<32x384xbf16>
    %cst_118 = arith.constant dense<0.000000e+00> : vector<2x4x384xf32>
    %185 = tpu.matmul %183, %184, %cst_118 {dimension_numbers = #tpu.dot_dimension_numbers<[2], [0], [0, 1], [1], [0, 0, 0, 1, 1, 1], [], []>} : vector<2x4x32xbf16>, vector<32x384xbf16>, vector<2x4x384xf32> -> vector<2x4x384xf32>
    %186 = arith.addf %182, %185 : vector<2x4x384xf32>
    %187 = vector.extract_strided_slice %177 {offsets = [0, 2, 0], sizes = [2, 4, 32], strides = [1, 1, 1]} : vector<2x8x32xbf16> to vector<2x4x32xbf16>
    %c64 = arith.constant 64 : index
    %c0_119 = arith.constant 0 : index
    %188 = vector.load %arg3[%c64, %c0_119] : memref<160x384xbf16, #tpu.memory_space<vmem>>, vector<32x384xbf16>
    %cst_120 = arith.constant dense<0.000000e+00> : vector<2x4x384xf32>
    %189 = tpu.matmul %187, %188, %cst_120 {dimension_numbers = #tpu.dot_dimension_numbers<[2], [0], [0, 1], [1], [0, 0, 0, 1, 1, 1], [], []>} : vector<2x4x32xbf16>, vector<32x384xbf16>, vector<2x4x384xf32> -> vector<2x4x384xf32>
    %190 = arith.addf %186, %189 : vector<2x4x384xf32>
    %191 = vector.extract_strided_slice %177 {offsets = [0, 3, 0], sizes = [2, 4, 32], strides = [1, 1, 1]} : vector<2x8x32xbf16> to vector<2x4x32xbf16>
    %c96 = arith.constant 96 : index
    %c0_121 = arith.constant 0 : index
    %192 = vector.load %arg3[%c96, %c0_121] : memref<160x384xbf16, #tpu.memory_space<vmem>>, vector<32x384xbf16>
    %cst_122 = arith.constant dense<0.000000e+00> : vector<2x4x384xf32>
    %193 = tpu.matmul %191, %192, %cst_122 {dimension_numbers = #tpu.dot_dimension_numbers<[2], [0], [0, 1], [1], [0, 0, 0, 1, 1, 1], [], []>} : vector<2x4x32xbf16>, vector<32x384xbf16>, vector<2x4x384xf32> -> vector<2x4x384xf32>
    %194 = arith.addf %190, %193 : vector<2x4x384xf32>
    %195 = vector.extract_strided_slice %177 {offsets = [0, 4, 0], sizes = [2, 4, 32], strides = [1, 1, 1]} : vector<2x8x32xbf16> to vector<2x4x32xbf16>
    %c128 = arith.constant 128 : index
    %c0_123 = arith.constant 0 : index
    %196 = vector.load %arg3[%c128, %c0_123] : memref<160x384xbf16, #tpu.memory_space<vmem>>, vector<32x384xbf16>
    %cst_124 = arith.constant dense<0.000000e+00> : vector<2x4x384xf32>
    %197 = tpu.matmul %195, %196, %cst_124 {dimension_numbers = #tpu.dot_dimension_numbers<[2], [0], [0, 1], [1], [0, 0, 0, 1, 1, 1], [], []>} : vector<2x4x32xbf16>, vector<32x384xbf16>, vector<2x4x384xf32> -> vector<2x4x384xf32>
    %198 = arith.addf %194, %197 : vector<2x4x384xf32>
    %c0_125 = arith.constant 0 : index
    %c0_126 = arith.constant 0 : index
    %199 = vector.load %arg4[%c0_125, %c0_126] : memref<1x384xf32, #tpu.memory_space<vmem>>, vector<1x384xf32>
    %200 = vector.shape_cast %199 : vector<1x384xf32> to vector<1x1x384xf32>
    %201 = vector.broadcast %200 : vector<1x1x384xf32> to vector<2x4x384xf32>
    %202 = arith.addf %198, %201 : vector<2x4x384xf32>
    %cst_127 = arith.constant 0.000000e+00 : f32
    %203 = vector.broadcast %cst_127 : f32 to vector<2x4x384xf32>
    %204 = arith.maximumf %202, %203 : vector<2x4x384xf32>
    %cst_128 = arith.constant dense<0xFF800000> : vector<2x384xf32>
    %205 = vector.multi_reduction <maximumf>, %204, %cst_128 [1] : vector<2x4x384xf32> to vector<2x384xf32>
    %c0_129 = arith.constant 0 : index
    %c0_130 = arith.constant 0 : index
    %206 = vector.load %arg5[%c0_129, %c0_130] : memref<1x384xf32, #tpu.memory_space<vmem>>, vector<1x384xf32>
    %cst_131 = arith.constant dense<0.000000e+00> : vector<1x2xf32>
    %207 = tpu.matmul %206, %205, %cst_131 {dimension_numbers = #tpu.dot_dimension_numbers<[1], [1], [0], [0], [0, 0, 1, 0], [], []>} : vector<1x384xf32>, vector<2x384xf32>, vector<1x2xf32> -> vector<1x2xf32>
    %c0_132 = arith.constant 0 : index
    %c0_133 = arith.constant 0 : index
    %208 = vector.load %arg6[%c0_132, %c0_133] : memref<1x1xf32, #tpu.memory_space<vmem>>, vector<1x1xf32>
    %209 = vector.broadcast %208 : vector<1x1xf32> to vector<1x2xf32>
    %210 = arith.addf %207, %209 : vector<1x2xf32>
    %c0_134 = arith.constant 0 : index
    %c0_135 = arith.constant 0 : index
    %211 = vector.load %arg7[%c0_134, %c0_135] : memref<1x2xf32, #tpu.memory_space<vmem>>, vector<1x2xf32>
    tpu.vector_store %arg7[%c0_134, %c0_135], %210 {strides = array<i32>} : memref<1x2xf32, #tpu.memory_space<vmem>>, vector<1x2xf32>,
    return
  }
  func.func @transform_0(%arg0: i32, %arg1: memref<16xi32, #tpu.memory_space<smem>>) -> (i32, i32) {
    %c0_i32 = arith.constant 0 : i32
    %c0_i32_0 = arith.constant 0 : i32
    %c0_i32_1 = arith.constant 0 : i32
    return %c0_i32, %c0_i32_0 : i32, i32
  }
  func.func @transform_1(%arg0: i32, %arg1: memref<16xi32, #tpu.memory_space<smem>>) -> (i32, i32) {
    %c0_i32 = arith.constant 0 : i32
    %c0_i32_0 = arith.constant 0 : i32
    %c0_i32_1 = arith.constant 0 : i32
    return %c0_i32, %c0_i32_0 : i32, i32
  }
  func.func @transform_2(%arg0: i32, %arg1: memref<16xi32, #tpu.memory_space<smem>>) -> (i32, i32) {
    %c0_i32 = arith.constant 0 : i32
    %c0_i32_0 = arith.constant 0 : i32
    %c0_i32_1 = arith.constant 0 : i32
    return %c0_i32, %c0_i32_0 : i32, i32
  }
  func.func @transform_3(%arg0: i32, %arg1: memref<16xi32, #tpu.memory_space<smem>>) -> (i32, i32) {
    %c0_i32 = arith.constant 0 : i32
    %c0_i32_0 = arith.constant 0 : i32
    %c0_i32_1 = arith.constant 0 : i32
    return %c0_i32, %c0_i32_0 : i32, i32
  }
  func.func @transform_4(%arg0: i32, %arg1: memref<16xi32, #tpu.memory_space<smem>>) -> (i32, i32) {
    %c0_i32 = arith.constant 0 : i32
    %c0_i32_0 = arith.constant 0 : i32
    %c0_i32_1 = arith.constant 0 : i32
    return %c0_i32, %c0_i32_0 : i32, i32
  }
  func.func @transform_5(%arg0: i32, %arg1: memref<16xi32, #tpu.memory_space<smem>>) -> (i32, i32) {
    %c0_i32 = arith.constant 0 : i32
    %c0_i32_0 = arith.constant 0 : i32
    return %arg0, %c0_i32 : i32, i32
  }
}

</mosaic_0001>

<llo_original>
// kernel: tpu_custom_call.1
$region0: #{tpu_custom_call.1}
  #allocation0 [shape = 'u32[]', space=smem, size = 0x4, offset = 0x4, fixed_abs, tag = 'smem constant byte address 0x4 - core index']
  #allocation1 [shape = 'u32[144,128]{1,0:T(1,128)}', space=vmem, size = 0x12000, scoped, tag = 'internal scratch']
  #allocation2 [shape = 'f32[2,8,32]{2,1,0:T(8,128)}', space=vmem, size = 0x2000, scoped, tag = 'scratch operand']
  #allocation3 [shape = 's32[1]{0}', space=sflag, size = 0x4, scoped, tag = 'scoped memory for tpu_custom_call.1']
  #allocation4 [shape = 'u8[512]{0}', space=smem, size = 0x200, scoped, tag = 'prefetched SMEM operand 0']
  #allocation5 [shape = 'f32[1,1]{1,0:T(1,128)S(1)}', space=vmem, size = 0x200, scoped, tag = 'scoped memory for tpu_custom_call.1']
  %s0 = inlined_call_operand.vmem [shape: s32[16], index: 0, kind: input, shape index: {}]
  %s1 = inlined_call_operand.hbm [shape: f32[8,32], index: 1, kind: input, shape index: {}]
  %s2 = inlined_call_operand.hbm [shape: bf16[160,384], index: 2, kind: input, shape index: {}]
  %s3 = inlined_call_operand.vmem [shape: f32[1,384], index: 3, kind: input, shape index: {}]
  %s4 = inlined_call_operand.vmem [shape: f32[1,384], index: 4, kind: input, shape index: {}]
  %s5 = inlined_call_operand.<no memory space> [shape: f32[1,1], index: 5, kind: input, shape index: {}]
  %s6 = inlined_call_operand.hbm [shape: f32[1,2], index: 6, kind: output, shape index: {}]
  %s7 = sld [smem:[#allocation0]]
  $region38: #{tpu_custom_call.1} parent=0
    _
  %s9 = ssub.s32 1, %s7
  %s10 = scalar_select 0, %s9, %s7
  %s11 = sshll.u32 %s0, 4
  %s12 = int_to_ptr.vmem [resolvable:$true] %s11
  %14 = dma.vmem_to_smem %s12, 16, [#allocation4], [#allocation3]
  %v15 = vstv %s5
  %16 = vst [vmem:[#allocation5] sm:$0x1] %v15
  %17 = dma.done [#allocation3], 16
  %18 = sfence
  $region1: #{tpu_custom_call.1} parent=0
    #allocation6 [shape = 'u8[4096]{0}', space=vmem, size = 0x1000, scoped, tag = 'input window, operand 1, single buffered']
    #allocation7 [shape = 's32[1]{0}', space=sflag, size = 0x4, scoped, tag = 'scoped memory for tpu_custom_call.1']
    #allocation8 [shape = 's32[1]{0}', space=sflag, size = 0x4, scoped, tag = 'scoped memory for tpu_custom_call.1']
    #allocation9 [shape = 'u8[122880]{0}', space=vmem, size = 0x1e000, scoped, tag = 'input window, operand 2, single buffered']
    #allocation10 [shape = 's32[1]{0}', space=sflag, size = 0x4, scoped, tag = 'scoped memory for tpu_custom_call.1']
    #allocation11 [shape = 'u8[512]{0}', space=vmem, size = 0x400, scoped, tag = 'output window, operand 0, single buffered']
    %19 = vsyncpa [#allocation7], 0
    %20 = vsyncpa [#allocation10], 0
    %21 = vsyncpa [#allocation8], 0
    // Predicated region
    $region2: #{tpu_custom_call.1} parent=1 // pred_check
      _
    $region3: #{tpu_custom_call.1} parent=1 // pred_check_branch
      %23 = sbr.rel (0) target = $region5
    $region4: #{tpu_custom_call.1} parent=1 // pred_region
      %s25 = ssub.s32 128, 128
      %26 = vsyncadd [#allocation7], %s25
      %s28 = sshll.u32 [#allocation6], 4
      %s29 = int_to_ptr.vmem [resolvable:$true] %s28
      %31 = dma.hbm_to_vmem [thread:$0]  %s1, 128, %s29, [#allocation7]
    $region5: #{tpu_custom_call.1} parent=1 // pred_fallthru
      _
    // Predicated region
    $region6: #{tpu_custom_call.1} parent=1 // pred_check
      _
    $region7: #{tpu_custom_call.1} parent=1 // pred_check_branch
      %33 = sbr.rel (0) target = $region9
    $region8: #{tpu_custom_call.1} parent=1 // pred_region
      %s35 = ssub.s32 3840, 3840
      %36 = vsyncadd [#allocation10], %s35
      %s37 = sshll.u32 [#allocation9], 4
      %s38 = int_to_ptr.vmem [resolvable:$true] %s37
      %43 = dma.hbm_to_vmem [thread:$0]  %s2, 3840, %s38, [#allocation10], 192, 192, 12
    $region9: #{tpu_custom_call.1} parent=1 // pred_fallthru
      _
    // Predicated region
    $region10: #{tpu_custom_call.1} parent=1 // pred_check
      _
    $region11: #{tpu_custom_call.1} parent=1 // pred_check_branch
      %45 = sbr.rel (0) target = $region13
    $region12: #{tpu_custom_call.1} parent=1 // pred_region
      _
    $region13: #{tpu_custom_call.1} parent=1 // pred_fallthru
      _
    // Predicated region
    $region14: #{tpu_custom_call.1} parent=1 // pred_check
      _
    $region15: #{tpu_custom_call.1} parent=1 // pred_check_branch
      %47 = sbr.rel (0) target = $region17
    $region16: #{tpu_custom_call.1} parent=1 // pred_region
      _
    $region17: #{tpu_custom_call.1} parent=1 // pred_fallthru
      _
    // Predicated region
    $region18: #{tpu_custom_call.1} parent=1 // pred_check
      _
    $region19: #{tpu_custom_call.1} parent=1 // pred_check_branch
      %49 = sbr.rel (0) target = $region21
    $region20: #{tpu_custom_call.1} parent=1 // pred_region
      _
    $region21: #{tpu_custom_call.1} parent=1 // pred_fallthru
      _
    // Predicated region
    $region22: #{tpu_custom_call.1} parent=1 // pred_check
      _
    $region23: #{tpu_custom_call.1} parent=1 // pred_check_branch
      %51 = sbr.rel (0) target = $region25
    $region24: #{tpu_custom_call.1} parent=1 // pred_region
      %52 = dma.done [#allocation7], 128
    $region25: #{tpu_custom_call.1} parent=1 // pred_fallthru
      _
    // Predicated region
    $region26: #{tpu_custom_call.1} parent=1 // pred_check
      _
    $region27: #{tpu_custom_call.1} parent=1 // pred_check_branch
      %54 = sbr.rel (0) target = $region29
    $region28: #{tpu_custom_call.1} parent=1 // pred_region
      %55 = dma.done [#allocation10], 3840
    $region29: #{tpu_custom_call.1} parent=1 // pred_fallthru
      _
    %s57 = smul.u32 0, 16
    %s58 = sld [smem:[#allocation4 + %s57]]
    %s59 = scalar_lea.vmem [#allocation6], %s58
    %v60 = vld [vmem:[%s59] sm:$0x1]
    %vm61 = vcmask 253952
    %62 = vst.msk [vmem:[#allocation2] sm:$0x1] %vm61, %v60
    %s63 = sadd.s32 %s57, 1
    %s64 = sld [smem:[#allocation4 + %s63]]
    %s65 = scalar_lea.vmem [#allocation6], %s64
    %v66 = vld [vmem:[%s65] sm:$0x1]
    %67 = vst.msk [vmem:[#allocation2 + $0x1] sm:$0x1] %vm61, %v66
    %s68 = sadd.s32 %s57, 2
    %s69 = sld [smem:[#allocation4 + %s68]]
    %s70 = scalar_lea.vmem [#allocation6], %s69
    %v71 = vld [vmem:[%s70] sm:$0x1]
    %72 = vst.msk [vmem:[#allocation2 + $0x2] sm:$0x1] %vm61, %v71
    %s73 = sadd.s32 %s57, 3
    %s74 = sld [smem:[#allocation4 + %s73]]
    %s75 = scalar_lea.vmem [#allocation6], %s74
    %v76 = vld [vmem:[%s75] sm:$0x1]
    %77 = vst.msk [vmem:[#allocation2 + $0x3] sm:$0x1] %vm61, %v76
    %s78 = sadd.s32 %s57, 4
    %s79 = sld [smem:[#allocation4 + %s78]]
    %s80 = scalar_lea.vmem [#allocation6], %s79
    %v81 = vld [vmem:[%s80] sm:$0x1]
    %82 = vst.msk [vmem:[#allocation2 + $0x4] sm:$0x1] %vm61, %v81
    %s83 = sadd.s32 %s57, 5
    %s84 = sld [smem:[#allocation4 + %s83]]
    %s85 = scalar_lea.vmem [#allocation6], %s84
    %v86 = vld [vmem:[%s85] sm:$0x1]
    %87 = vst.msk [vmem:[#allocation2 + $0x5] sm:$0x1] %vm61, %v86
    %s88 = sadd.s32 %s57, 6
    %s89 = sld [smem:[#allocation4 + %s88]]
    %s90 = scalar_lea.vmem [#allocation6], %s89
    %v91 = vld [vmem:[%s90] sm:$0x1]
    %92 = vst.msk [vmem:[#allocation2 + $0x6] sm:$0x1] %vm61, %v91
    %s93 = sadd.s32 %s57, 7
    %s94 = sld [smem:[#allocation4 + %s93]]
    %s95 = scalar_lea.vmem [#allocation6], %s94
    %v96 = vld [vmem:[%s95] sm:$0x1]
    %97 = vst.msk [vmem:[#allocation2 + $0x7] sm:$0x1] %vm61, %v96
    %s98 = smul.u32 0, 2
    %s99 = sadd.s32 %s98, 1
    %s100 = smul.u32 %s99, 8
    %s101 = sld [smem:[#allocation4 + %s100]]
    %s102 = scalar_lea.vmem [#allocation6], %s101
    %v103 = vld [vmem:[%s102] sm:$0x1]
    %s104 = scalar_lea.vmem [#allocation2], 8
    %105 = vst.msk [vmem:[%s104] sm:$0x1] %vm61, %v103
    %s106 = sadd.s32 %s100, 1
    %s107 = sld [smem:[#allocation4 + %s106]]
    %s108 = scalar_lea.vmem [#allocation6], %s107
    %v109 = vld [vmem:[%s108] sm:$0x1]
    %110 = vst.msk [vmem:[%s104 + $0x1] sm:$0x1] %vm61, %v109
    %s111 = sadd.s32 %s100, 2
    %s112 = sld [smem:[#allocation4 + %s111]]
    %s113 = scalar_lea.vmem [#allocation6], %s112
    %v114 = vld [vmem:[%s113] sm:$0x1]
    %115 = vst.msk [vmem:[%s104 + $0x2] sm:$0x1] %vm61, %v114
    %s116 = sadd.s32 %s100, 3
    %s117 = sld [smem:[#allocation4 + %s116]]
    %s118 = scalar_lea.vmem [#allocation6], %s117
    %v119 = vld [vmem:[%s118] sm:$0x1]
    %120 = vst.msk [vmem:[%s104 + $0x3] sm:$0x1] %vm61, %v119
    %s121 = sadd.s32 %s100, 4
    %s122 = sld [smem:[#allocation4 + %s121]]
    %s123 = scalar_lea.vmem [#allocation6], %s122
    %v124 = vld [vmem:[%s123] sm:$0x1]
    %125 = vst.msk [vmem:[%s104 + $0x4] sm:$0x1] %vm61, %v124
    %s126 = sadd.s32 %s100, 5
    %s127 = sld [smem:[#allocation4 + %s126]]
    %s128 = scalar_lea.vmem [#allocation6], %s127
    %v129 = vld [vmem:[%s128] sm:$0x1]
    %130 = vst.msk [vmem:[%s104 + $0x5] sm:$0x1] %vm61, %v129
    %s131 = sadd.s32 %s100, 6
    %s132 = sld [smem:[#allocation4 + %s131]]
    %s133 = scalar_lea.vmem [#allocation6], %s132
    %v134 = vld [vmem:[%s133] sm:$0x1]
    %135 = vst.msk [vmem:[%s104 + $0x6] sm:$0x1] %vm61, %v134
    %s136 = sadd.s32 %s100, 7
    %s137 = sld [smem:[#allocation4 + %s136]]
    %s138 = scalar_lea.vmem [#allocation6], %s137
    %v139 = vld [vmem:[%s138] sm:$0x1]
    %140 = vst.msk [vmem:[%s104 + $0x7] sm:$0x1] %vm61, %v139
    %v141 = vld [vmem:[#allocation2] sm:$0xff]
    %v142 = vld [vmem:[#allocation2 + $0x8] sm:$0xff]
    %v143 = vpack.c.bf16 %v141, %v141
    %v144 = vpack.c.bf16 %v142, %v142
    %v145 = vld [vmem:[#allocation9] sm:$0xff]
    %v146 = vld [vmem:[#allocation9 + $0x8] sm:$0xf]
    %v147 = vld [vmem:[#allocation9 + $0xc] sm:$0xff]
    %v148 = vld [vmem:[#allocation9 + $0x14] sm:$0xf]
    %v149 = vld [vmem:[#allocation9 + $0x18] sm:$0xff]
    %v150 = vld [vmem:[#allocation9 + $0x20] sm:$0xf]
    %v151 = vld [vmem:[#allocation9 + $0x24] sm:$0xff]
    %v152 = vld [vmem:[#allocation9 + $0x2c] sm:$0xf]
    %v153 = vld [vmem:[#allocation9 + $0x30] sm:$0xff]
    %v154 = vld [vmem:[#allocation9 + $0x38] sm:$0xf]
    %v155 = vld [vmem:[#allocation9 + $0x3c] sm:$0xff]
    %v156 = vld [vmem:[#allocation9 + $0x44] sm:$0xf]
    %v157 = vld [vmem:[#allocation9 + $0x48] sm:$0xff]
    %v158 = vld [vmem:[#allocation9 + $0x50] sm:$0xf]
    %v159 = vld [vmem:[#allocation9 + $0x54] sm:$0xff]
    %v160 = vld [vmem:[#allocation9 + $0x5c] sm:$0xf]
    %v164 = vunpack.c.l.s4 1983009808
    %v165 = vunpack.c.0.s8 %v164
    %v166 = vlaneseq
    %v167 = vshrl.u32 %v166, 7
    %v168 = vsub.s32 %v165, %v167
    %v169 = vrot.slane %v143, %v168
    %v170 = vcombine.high %v169, %v169
    %v172 = vunpack.c.l.s4 1983009808
    %v173 = vunpack.c.0.s8 %v172
    %v174 = vlaneseq
    %v175 = vshrl.u32 %v174, 7
    %v176 = vsub.s32 %v173, %v175
    %v177 = vrot.slane %v144, %v176
    %v178 = vcombine.high %v177, %v177
    %vm179 = vsmask.f32 1280
    %vm180 = vsmask.f32 3336
    %vm181 = vmor %vm179, %vm180
    %vm182 = vsmask.f32 5392
    %vm183 = vmor %vm181, %vm182
    %vm184 = vsmask.f32 7448
    %vm185 = vmor %vm183, %vm184
    %v187 = vshrl.u32 %v169, 16
    %v189 = vrot.slane %v187, 6
    %v190 = vshll.u32 %v169, 16
    %v192 = vrot.slane %v190, 7
    %v193 = vor.u32 %v189, %v192
    %v194 = vrot.slane %v193, 2
    %v196 = vshll.u32 %v170, 16
    %v198 = vrot.slane %v196, 7
    %v199 = vsel %vm185, %v194, %v198
    %v201 = vshrl.u32 %v177, 16
    %v203 = vrot.slane %v201, 6
    %v204 = vshll.u32 %v177, 16
    %v206 = vrot.slane %v204, 7
    %v207 = vor.u32 %v203, %v206
    %v208 = vrot.slane %v207, 2
    %v210 = vshll.u32 %v178, 16
    %v212 = vrot.slane %v210, 7
    %v213 = vsel %vm185, %v208, %v212
    %v214 = vcombine.low %v199, %v213
    %v216 = vunpack.c.l.s4 1983009808
    %v217 = vunpack.c.0.s8 %v216
    %v218 = vlaneseq
    %v219 = vshrl.u32 %v218, 7
    %v220 = vsub.s32 %v217, %v219
    %v221 = vrot.slane %v214, %v220
    %v230 = vunpack.c.l.b16 %v153
    %v231 = vunpack.c.h.b16 %v153
    %v232 = vunpack.c.l.b16 %v154
    %v233 = vunpack.c.l.b16 %v155
    %v234 = vunpack.c.h.b16 %v155
    %v235 = vunpack.c.l.b16 %v156
    %v236 = vunpack.c.l.b16 %v157
    %v237 = vunpack.c.h.b16 %v157
    %v238 = vunpack.c.l.b16 %v158
    %v239 = vunpack.c.l.b16 %v159
    %v240 = vunpack.c.h.b16 %v159
    %v241 = vunpack.c.l.b16 %v160
    %v242 = vpack.c.b16 %v233, %v230
    %v243 = vpack.c.b16 %v234, %v231
    %v244 = vpack.c.b16 %v235, %v232
    %v245 = vpack.c.b16 %v239, %v236
    %v246 = vpack.c.b16 %v240, %v237
    %v247 = vpack.c.b16 %v241, %v238
    %vm254 = vcmask 261120
    %v256 = vsel %vm254, %v221, 0
    %258 = vmatprep.subr.bf16.mxu0 0
    %259 = vmatpush1.bf16.msra.mxu0 0
    %260 = vmatprep.subr.bf16.mxu0 0
    %261 = vmatpush1.bf16.msra.mxu0 0
    %262 = vmatprep.subr.bf16.mxu0 0
    %263 = vmatpush1.bf16.msra.mxu0 0
    %264 = vmatprep.subr.bf16.mxu0 0
    %265 = vmatpush1.bf16.msra.mxu0 0
    %266 = vmatprep.subr.bf16.mxu0 0
    %267 = vmatpush1.bf16.msra.mxu0 0
    %268 = vmatprep.subr.bf16.mxu0 0
    %269 = vmatpush1.bf16.msra.mxu0 0
    %270 = vmatprep.subr.bf16.mxu0 %v246
    %271 = vmatpush1.bf16.msra.mxu0 %v245
    %272 = vmatprep.subr.bf16.mxu0 %v243
    %273 = vmatpush1.bf16.msra.mxu0 %v242
    %274 = vmatprep.subr.bf16.mxu0 0
    %275 = vmatpush2.bf16.msra.mxu0 0
    %276 = vmatprep.subr.bf16.mxu0 0
    %277 = vmatpush2.bf16.msra.mxu0 0
    %278 = vmatprep.subr.bf16.mxu0 0
    %279 = vmatpush2.bf16.msra.mxu0 0
    %280 = vmatprep.subr.bf16.mxu0 0
    %281 = vmatpush2.bf16.msra.mxu0 0
    %282 = vmatprep.subr.bf16.mxu0 0
    %283 = vmatpush2.bf16.msra.mxu0 0
    %284 = vmatprep.subr.bf16.mxu0 0
    %285 = vmatpush2.bf16.msra.mxu0 0
    %286 = vmatprep.subr.bf16.mxu0 0
    %287 = vmatpush2.bf16.msra.mxu0 0
    %288 = vmatprep.subr.bf16.mxu0 0
    %289 = vmatpush2.bf16.msra.mxu0 0
    %290 = vmatprep.mubr.bf16.mxu0 0
    %291 = vmatmul.mubr.bf16.gmra.mxu0 %v256
    %v292 = vpop.f32.mrf.mxu0
    %v293 = vadd.f32 0.0, %v292
    %v294 = vpop.f32.mrf.mxu0
    %v295 = vadd.f32 0.0, %v294
    %v296 = vpop.f32.mrf.mxu0
    %v297 = vpop.f32.mrf.mxu0
    %298 = vdwg.mxu0
    %299 = vmatprep.subr.bf16.mxu0 0
    %300 = vmatpush1.bf16.msra.mxu0 0
    %301 = vmatprep.subr.bf16.mxu0 0
    %302 = vmatpush1.bf16.msra.mxu0 0
    %303 = vmatprep.subr.bf16.mxu0 0
    %304 = vmatpush1.bf16.msra.mxu0 0
    %305 = vmatprep.subr.bf16.mxu0 0
    %306 = vmatpush1.bf16.msra.mxu0 0
    %307 = vmatprep.subr.bf16.mxu0 0
    %308 = vmatpush1.bf16.msra.mxu0 0
    %309 = vmatprep.subr.bf16.mxu0 0
    %310 = vmatpush1.bf16.msra.mxu0 0
    %311 = vmatprep.subr.bf16.mxu0 0
    %312 = vmatpush1.bf16.msra.mxu0 %v247
    %313 = vmatprep.subr.bf16.mxu0 0
    %314 = vmatpush1.bf16.msra.mxu0 %v244
    %315 = vmatprep.subr.bf16.mxu0 0
    %316 = vmatpush2.bf16.msra.mxu0 0
    %317 = vmatprep.subr.bf16.mxu0 0
    %318 = vmatpush2.bf16.msra.mxu0 0
    %319 = vmatprep.subr.bf16.mxu0 0
    %320 = vmatpush2.bf16.msra.mxu0 0
    %321 = vmatprep.subr.bf16.mxu0 0
    %322 = vmatpush2.bf16.msra.mxu0 0
    %323 = vmatprep.subr.bf16.mxu0 0
    %324 = vmatpush2.bf16.msra.mxu0 0
    %325 = vmatprep.subr.bf16.mxu0 0
    %326 = vmatpush2.bf16.msra.mxu0 0
    %327 = vmatprep.subr.bf16.mxu0 0
    %328 = vmatpush2.bf16.msra.mxu0 0
    %329 = vmatprep.subr.bf16.mxu0 0
    %330 = vmatpush2.bf16.msra.mxu0 0
    %331 = vmatprep.mubr.bf16.mxu0 0
    %332 = vmatmul.mubr.bf16.gmra.mxu0 %v256
    %v333 = vpop.f32.mrf.mxu0
    %v334 = vadd.f32 0.0, %v333
    %v335 = vpop.f32.mrf.mxu0
    %v336 = vpop.f32.mrf.mxu0
    %v337 = vpop.f32.mrf.mxu0
    %338 = vdwg.mxu0
    %v339 = vcombine.low %v143, %v144
    %v341 = vunpack.c.l.s4 1983009808
    %v342 = vunpack.c.0.s8 %v341
    %v343 = vlaneseq
    %v344 = vshrl.u32 %v343, 7
    %v345 = vsub.s32 %v342, %v344
    %v346 = vrot.slane %v339, %v345
    %v355 = vunpack.c.l.b16 %v145
    %v356 = vunpack.c.h.b16 %v145
    %v357 = vunpack.c.l.b16 %v146
    %v358 = vunpack.c.l.b16 %v147
    %v359 = vunpack.c.h.b16 %v147
    %v360 = vunpack.c.l.b16 %v148
    %v361 = vunpack.c.l.b16 %v149
    %v362 = vunpack.c.h.b16 %v149
    %v363 = vunpack.c.l.b16 %v150
    %v364 = vunpack.c.l.b16 %v151
    %v365 = vunpack.c.h.b16 %v151
    %v366 = vunpack.c.l.b16 %v152
    %v367 = vpack.c.b16 %v358, %v355
    %v368 = vpack.c.b16 %v359, %v356
    %v369 = vpack.c.b16 %v360, %v357
    %v370 = vpack.c.b16 %v364, %v361
    %v371 = vpack.c.b16 %v365, %v362
    %v372 = vpack.c.b16 %v366, %v363
    %v380 = vsel %vm254, %v346, 0
    %382 = vmatprep.subr.bf16.mxu0 0
    %383 = vmatpush1.bf16.msra.mxu0 0
    %384 = vmatprep.subr.bf16.mxu0 0
    %385 = vmatpush1.bf16.msra.mxu0 0
    %386 = vmatprep.subr.bf16.mxu0 0
    %387 = vmatpush1.bf16.msra.mxu0 0
    %388 = vmatprep.subr.bf16.mxu0 0
    %389 = vmatpush1.bf16.msra.mxu0 0
    %390 = vmatprep.subr.bf16.mxu0 0
    %391 = vmatpush1.bf16.msra.mxu0 0
    %392 = vmatprep.subr.bf16.mxu0 0
    %393 = vmatpush1.bf16.msra.mxu0 0
    %394 = vmatprep.subr.bf16.mxu0 %v371
    %395 = vmatpush1.bf16.msra.mxu0 %v370
    %396 = vmatprep.subr.bf16.mxu0 %v368
    %397 = vmatpush1.bf16.msra.mxu0 %v367
    %398 = vmatprep.subr.bf16.mxu0 0
    %399 = vmatpush2.bf16.msra.mxu0 0
    %400 = vmatprep.subr.bf16.mxu0 0
    %401 = vmatpush2.bf16.msra.mxu0 0
    %402 = vmatprep.subr.bf16.mxu0 0
    %403 = vmatpush2.bf16.msra.mxu0 0
    %404 = vmatprep.subr.bf16.mxu0 0
    %405 = vmatpush2.bf16.msra.mxu0 0
    %406 = vmatprep.subr.bf16.mxu0 0
    %407 = vmatpush2.bf16.msra.mxu0 0
    %408 = vmatprep.subr.bf16.mxu0 0
    %409 = vmatpush2.bf16.msra.mxu0 0
    %410 = vmatprep.subr.bf16.mxu0 0
    %411 = vmatpush2.bf16.msra.mxu0 0
    %412 = vmatprep.subr.bf16.mxu0 0
    %413 = vmatpush2.bf16.msra.mxu0 0
    %414 = vmatprep.mubr.bf16.mxu0 0
    %415 = vmatmul.mubr.bf16.gmra.mxu0 %v380
    %v416 = vpop.f32.mrf.mxu0
    %v417 = vadd.f32 %v293, %v416
    %v418 = vpop.f32.mrf.mxu0
    %v419 = vadd.f32 %v295, %v418
    %v420 = vpop.f32.mrf.mxu0
    %v421 = vpop.f32.mrf.mxu0
    %422 = vdwg.mxu0
    %423 = vmatprep.subr.bf16.mxu0 0
    %424 = vmatpush1.bf16.msra.mxu0 0
    %425 = vmatprep.subr.bf16.mxu0 0
    %426 = vmatpush1.bf16.msra.mxu0 0
    %427 = vmatprep.subr.bf16.mxu0 0
    %428 = vmatpush1.bf16.msra.mxu0 0
    %429 = vmatprep.subr.bf16.mxu0 0
    %430 = vmatpush1.bf16.msra.mxu0 0
    %431 = vmatprep.subr.bf16.mxu0 0
    %432 = vmatpush1.bf16.msra.mxu0 0
    %433 = vmatprep.subr.bf16.mxu0 0
    %434 = vmatpush1.bf16.msra.mxu0 0
    %435 = vmatprep.subr.bf16.mxu0 0
    %436 = vmatpush1.bf16.msra.mxu0 %v372
    %437 = vmatprep.subr.bf16.mxu0 0
    %438 = vmatpush1.bf16.msra.mxu0 %v369
    %439 = vmatprep.subr.bf16.mxu0 0
    %440 = vmatpush2.bf16.msra.mxu0 0
    %441 = vmatprep.subr.bf16.mxu0 0
    %442 = vmatpush2.bf16.msra.mxu0 0
    %443 = vmatprep.subr.bf16.mxu0 0
    %444 = vmatpush2.bf16.msra.mxu0 0
    %445 = vmatprep.subr.bf16.mxu0 0
    %446 = vmatpush2.bf16.msra.mxu0 0
    %447 = vmatprep.subr.bf16.mxu0 0
    %448 = vmatpush2.bf16.msra.mxu0 0
    %449 = vmatprep.subr.bf16.mxu0 0
    %450 = vmatpush2.bf16.msra.mxu0 0
    %451 = vmatprep.subr.bf16.mxu0 0
    %452 = vmatpush2.bf16.msra.mxu0 0
    %453 = vmatprep.subr.bf16.mxu0 0
    %454 = vmatpush2.bf16.msra.mxu0 0
    %455 = vmatprep.mubr.bf16.mxu0 0
    %456 = vmatmul.mubr.bf16.gmra.mxu0 %v380
    %v457 = vpop.f32.mrf.mxu0
    %v458 = vadd.f32 %v334, %v457
    %v459 = vpop.f32.mrf.mxu0
    %v460 = vpop.f32.mrf.mxu0
    %v461 = vpop.f32.mrf.mxu0
    %462 = vdwg.mxu0
    %v466 = vcombine.low %v417, %v419
    %v467 = vcombine.high %v417, %v419
    %v468 = vcombine.high %v458, %v458
    %v472 = vld [vmem:[#allocation9 + $0x60] sm:$0xff]
    %v473 = vld [vmem:[#allocation9 + $0x68] sm:$0xf]
    %v474 = vld [vmem:[#allocation9 + $0x6c] sm:$0xff]
    %v475 = vld [vmem:[#allocation9 + $0x74] sm:$0xf]
    %v476 = vld [vmem:[#allocation9 + $0x78] sm:$0xff]
    %v477 = vld [vmem:[#allocation9 + $0x80] sm:$0xf]
    %v478 = vld [vmem:[#allocation9 + $0x84] sm:$0xff]
    %v479 = vld [vmem:[#allocation9 + $0x8c] sm:$0xf]
    %vm480 = vcmask 1040384
    %vm481 = vcmask 1042434
    %vm482 = vmor %vm480, %vm481
    %vm483 = vcmask 1044484
    %vm484 = vmor %vm482, %vm483
    %vm485 = vcmask 1046534
    %vm486 = vmor %vm484, %vm485
    %v487 = vrot.slane %v169, 7
    %v488 = vrot.slane %v487, 2
    %v489 = vrot.slane %v170, 7
    %v490 = vsel %vm486, %v488, %v489
    %v491 = vrot.slane %v177, 7
    %v492 = vrot.slane %v491, 2
    %v493 = vrot.slane %v178, 7
    %v494 = vsel %vm486, %v492, %v493
    %v495 = vcombine.low %v490, %v494
    %v497 = vunpack.c.l.s4 1983009808
    %v498 = vunpack.c.0.s8 %v497
    %v499 = vlaneseq
    %v500 = vshrl.u32 %v499, 7
    %v501 = vsub.s32 %v498, %v500
    %v502 = vrot.slane %v495, %v501
    %v511 = vunpack.c.l.b16 %v472
    %v512 = vunpack.c.h.b16 %v472
    %v513 = vunpack.c.l.b16 %v473
    %v514 = vunpack.c.l.b16 %v474
    %v515 = vunpack.c.h.b16 %v474
    %v516 = vunpack.c.l.b16 %v475
    %v517 = vunpack.c.l.b16 %v476
    %v518 = vunpack.c.h.b16 %v476
    %v519 = vunpack.c.l.b16 %v477
    %v520 = vunpack.c.l.b16 %v478
    %v521 = vunpack.c.h.b16 %v478
    %v522 = vunpack.c.l.b16 %v479
    %v523 = vpack.c.b16 %v514, %v511
    %v524 = vpack.c.b16 %v515, %v512
    %v525 = vpack.c.b16 %v516, %v513
    %v526 = vpack.c.b16 %v520, %v517
    %v527 = vpack.c.b16 %v521, %v518
    %v528 = vpack.c.b16 %v522, %v519
    %v536 = vsel %vm254, %v502, 0
    %538 = vmatprep.subr.bf16.mxu0 0
    %539 = vmatpush1.bf16.msra.mxu0 0
    %540 = vmatprep.subr.bf16.mxu0 0
    %541 = vmatpush1.bf16.msra.mxu0 0
    %542 = vmatprep.subr.bf16.mxu0 0
    %543 = vmatpush1.bf16.msra.mxu0 0
    %544 = vmatprep.subr.bf16.mxu0 0
    %545 = vmatpush1.bf16.msra.mxu0 0
    %546 = vmatprep.subr.bf16.mxu0 0
    %547 = vmatpush1.bf16.msra.mxu0 0
    %548 = vmatprep.subr.bf16.mxu0 0
    %549 = vmatpush1.bf16.msra.mxu0 0
    %550 = vmatprep.subr.bf16.mxu0 %v527
    %551 = vmatpush1.bf16.msra.mxu0 %v526
    %552 = vmatprep.subr.bf16.mxu0 %v524
    %553 = vmatpush1.bf16.msra.mxu0 %v523
    %554 = vmatprep.subr.bf16.mxu0 0
    %555 = vmatpush2.bf16.msra.mxu0 0
    %556 = vmatprep.subr.bf16.mxu0 0
    %557 = vmatpush2.bf16.msra.mxu0 0
    %558 = vmatprep.subr.bf16.mxu0 0
    %559 = vmatpush2.bf16.msra.mxu0 0
    %560 = vmatprep.subr.bf16.mxu0 0
    %561 = vmatpush2.bf16.msra.mxu0 0
    %562 = vmatprep.subr.bf16.mxu0 0
    %563 = vmatpush2.bf16.msra.mxu0 0
    %564 = vmatprep.subr.bf16.mxu0 0
    %565 = vmatpush2.bf16.msra.mxu0 0
    %566 = vmatprep.subr.bf16.mxu0 0
    %567 = vmatpush2.bf16.msra.mxu0 0
    %568 = vmatprep.subr.bf16.mxu0 0
    %569 = vmatpush2.bf16.msra.mxu0 0
    %570 = vmatprep.mubr.bf16.mxu0 0
    %571 = vmatmul.mubr.bf16.gmra.mxu0 %v536
    %v572 = vpop.f32.mrf.mxu0
    %v573 = vadd.f32 0.0, %v572
    %v574 = vpop.f32.mrf.mxu0
    %v575 = vadd.f32 0.0, %v574
    %v576 = vpop.f32.mrf.mxu0
    %v577 = vpop.f32.mrf.mxu0
    %578 = vdwg.mxu0
    %579 = vmatprep.subr.bf16.mxu0 0
    %580 = vmatpush1.bf16.msra.mxu0 0
    %581 = vmatprep.subr.bf16.mxu0 0
    %582 = vmatpush1.bf16.msra.mxu0 0
    %583 = vmatprep.subr.bf16.mxu0 0
    %584 = vmatpush1.bf16.msra.mxu0 0
    %585 = vmatprep.subr.bf16.mxu0 0
    %586 = vmatpush1.bf16.msra.mxu0 0
    %587 = vmatprep.subr.bf16.mxu0 0
    %588 = vmatpush1.bf16.msra.mxu0 0
    %589 = vmatprep.subr.bf16.mxu0 0
    %590 = vmatpush1.bf16.msra.mxu0 0
    %591 = vmatprep.subr.bf16.mxu0 0
    %592 = vmatpush1.bf16.msra.mxu0 %v528
    %593 = vmatprep.subr.bf16.mxu0 0
    %594 = vmatpush1.bf16.msra.mxu0 %v525
    %595 = vmatprep.subr.bf16.mxu0 0
    %596 = vmatpush2.bf16.msra.mxu0 0
    %597 = vmatprep.subr.bf16.mxu0 0
    %598 = vmatpush2.bf16.msra.mxu0 0
    %599 = vmatprep.subr.bf16.mxu0 0
    %600 = vmatpush2.bf16.msra.mxu0 0
    %601 = vmatprep.subr.bf16.mxu0 0
    %602 = vmatpush2.bf16.msra.mxu0 0
    %603 = vmatprep.subr.bf16.mxu0 0
    %604 = vmatpush2.bf16.msra.mxu0 0
    %605 = vmatprep.subr.bf16.mxu0 0
    %606 = vmatpush2.bf16.msra.mxu0 0
    %607 = vmatprep.subr.bf16.mxu0 0
    %608 = vmatpush2.bf16.msra.mxu0 0
    %609 = vmatprep.subr.bf16.mxu0 0
    %610 = vmatpush2.bf16.msra.mxu0 0
    %611 = vmatprep.mubr.bf16.mxu0 0
    %612 = vmatmul.mubr.bf16.gmra.mxu0 %v536
    %v613 = vpop.f32.mrf.mxu0
    %v614 = vadd.f32 0.0, %v613
    %v615 = vpop.f32.mrf.mxu0
    %v616 = vpop.f32.mrf.mxu0
    %v617 = vpop.f32.mrf.mxu0
    %618 = vdwg.mxu0
    %v622 = vcombine.low %v573, %v575
    %v623 = vcombine.high %v573, %v575
    %v624 = vcombine.high %v614, %v614
    %v628 = vadd.f32 %v466, %v622
    %v629 = vadd.f32 %v458, %v614
    %v630 = vadd.f32 %v467, %v623
    %v631 = vadd.f32 %v468, %v624
    %v632 = vld [vmem:[#allocation9 + $0x90] sm:$0xff]
    %v633 = vld [vmem:[#allocation9 + $0x98] sm:$0xf]
    %v634 = vld [vmem:[#allocation9 + $0x9c] sm:$0xff]
    %v635 = vld [vmem:[#allocation9 + $0xa4] sm:$0xf]
    %v636 = vld [vmem:[#allocation9 + $0xa8] sm:$0xff]
    %v637 = vld [vmem:[#allocation9 + $0xb0] sm:$0xf]
    %v638 = vld [vmem:[#allocation9 + $0xb4] sm:$0xff]
    %v639 = vld [vmem:[#allocation9 + $0xbc] sm:$0xf]
    %vm640 = vsmask.f32 256
    %vm641 = vsmask.f32 2312
    %vm642 = vmor %vm640, %vm641
    %vm643 = vsmask.f32 4368
    %vm644 = vmor %vm642, %vm643
    %vm645 = vsmask.f32 6424
    %vm646 = vmor %vm644, %vm645
    %v647 = vrot.slane %v187, 7
    %v648 = vrot.slane %v647, 2
    %v649 = vshrl.u32 %v170, 16
    %v651 = vrot.slane %v649, 7
    %v652 = vor.u32 %v651, %v196
    %v653 = vsel %vm646, %v648, %v652
    %v654 = vrot.slane %v201, 7
    %v655 = vrot.slane %v654, 2
    %v656 = vshrl.u32 %v178, 16
    %v658 = vrot.slane %v656, 7
    %v659 = vor.u32 %v658, %v210
    %v660 = vsel %vm646, %v655, %v659
    %v661 = vcombine.low %v653, %v660
    %v663 = vunpack.c.l.s4 1983009808
    %v664 = vunpack.c.0.s8 %v663
    %v665 = vlaneseq
    %v666 = vshrl.u32 %v665, 7
    %v667 = vsub.s32 %v664, %v666
    %v668 = vrot.slane %v661, %v667
    %v677 = vunpack.c.l.b16 %v632
    %v678 = vunpack.c.h.b16 %v632
    %v679 = vunpack.c.l.b16 %v633
    %v680 = vunpack.c.l.b16 %v634
    %v681 = vunpack.c.h.b16 %v634
    %v682 = vunpack.c.l.b16 %v635
    %v683 = vunpack.c.l.b16 %v636
    %v684 = vunpack.c.h.b16 %v636
    %v685 = vunpack.c.l.b16 %v637
    %v686 = vunpack.c.l.b16 %v638
    %v687 = vunpack.c.h.b16 %v638
    %v688 = vunpack.c.l.b16 %v639
    %v689 = vpack.c.b16 %v680, %v677
    %v690 = vpack.c.b16 %v681, %v678
    %v691 = vpack.c.b16 %v682, %v679
    %v692 = vpack.c.b16 %v686, %v683
    %v693 = vpack.c.b16 %v687, %v684
    %v694 = vpack.c.b16 %v688, %v685
    %v702 = vsel %vm254, %v668, 0
    %704 = vmatprep.subr.bf16.mxu0 0
    %705 = vmatpush1.bf16.msra.mxu0 0
    %706 = vmatprep.subr.bf16.mxu0 0
    %707 = vmatpush1.bf16.msra.mxu0 0
    %708 = vmatprep.subr.bf16.mxu0 0
    %709 = vmatpush1.bf16.msra.mxu0 0
    %710 = vmatprep.subr.bf16.mxu0 0
    %711 = vmatpush1.bf16.msra.mxu0 0
    %712 = vmatprep.subr.bf16.mxu0 0
    %713 = vmatpush1.bf16.msra.mxu0 0
    %714 = vmatprep.subr.bf16.mxu0 0
    %715 = vmatpush1.bf16.msra.mxu0 0
    %716 = vmatprep.subr.bf16.mxu0 %v693
    %717 = vmatpush1.bf16.msra.mxu0 %v692
    %718 = vmatprep.subr.bf16.mxu0 %v690
    %719 = vmatpush1.bf16.msra.mxu0 %v689
    %720 = vmatprep.subr.bf16.mxu0 0
    %721 = vmatpush2.bf16.msra.mxu0 0
    %722 = vmatprep.subr.bf16.mxu0 0
    %723 = vmatpush2.bf16.msra.mxu0 0
    %724 = vmatprep.subr.bf16.mxu0 0
    %725 = vmatpush2.bf16.msra.mxu0 0
    %726 = vmatprep.subr.bf16.mxu0 0
    %727 = vmatpush2.bf16.msra.mxu0 0
    %728 = vmatprep.subr.bf16.mxu0 0
    %729 = vmatpush2.bf16.msra.mxu0 0
    %730 = vmatprep.subr.bf16.mxu0 0
    %731 = vmatpush2.bf16.msra.mxu0 0
    %732 = vmatprep.subr.bf16.mxu0 0
    %733 = vmatpush2.bf16.msra.mxu0 0
    %734 = vmatprep.subr.bf16.mxu0 0
    %735 = vmatpush2.bf16.msra.mxu0 0
    %736 = vmatprep.mubr.bf16.mxu0 0
    %737 = vmatmul.mubr.bf16.gmra.mxu0 %v702
    %v738 = vpop.f32.mrf.mxu0
    %v739 = vadd.f32 0.0, %v738
    %v740 = vpop.f32.mrf.mxu0
    %v741 = vadd.f32 0.0, %v740
    %v742 = vpop.f32.mrf.mxu0
    %v743 = vpop.f32.mrf.mxu0
    %744 = vdwg.mxu0
    %745 = vmatprep.subr.bf16.mxu0 0
    %746 = vmatpush1.bf16.msra.mxu0 0
    %747 = vmatprep.subr.bf16.mxu0 0
    %748 = vmatpush1.bf16.msra.mxu0 0
    %749 = vmatprep.subr.bf16.mxu0 0
    %750 = vmatpush1.bf16.msra.mxu0 0
    %751 = vmatprep.subr.bf16.mxu0 0
    %752 = vmatpush1.bf16.msra.mxu0 0
    %753 = vmatprep.subr.bf16.mxu0 0
    %754 = vmatpush1.bf16.msra.mxu0 0
    %755 = vmatprep.subr.bf16.mxu0 0
    %756 = vmatpush1.bf16.msra.mxu0 0
    %757 = vmatprep.subr.bf16.mxu0 0
    %758 = vmatpush1.bf16.msra.mxu0 %v694
    %759 = vmatprep.subr.bf16.mxu0 0
    %760 = vmatpush1.bf16.msra.mxu0 %v691
    %761 = vmatprep.subr.bf16.mxu0 0
    %762 = vmatpush2.bf16.msra.mxu0 0
    %763 = vmatprep.subr.bf16.mxu0 0
    %764 = vmatpush2.bf16.msra.mxu0 0
    %765 = vmatprep.subr.bf16.mxu0 0
    %766 = vmatpush2.bf16.msra.mxu0 0
    %767 = vmatprep.subr.bf16.mxu0 0
    %768 = vmatpush2.bf16.msra.mxu0 0
    %769 = vmatprep.subr.bf16.mxu0 0
    %770 = vmatpush2.bf16.msra.mxu0 0
    %771 = vmatprep.subr.bf16.mxu0 0
    %772 = vmatpush2.bf16.msra.mxu0 0
    %773 = vmatprep.subr.bf16.mxu0 0
    %774 = vmatpush2.bf16.msra.mxu0 0
    %775 = vmatprep.subr.bf16.mxu0 0
    %776 = vmatpush2.bf16.msra.mxu0 0
    %777 = vmatprep.mubr.bf16.mxu0 0
    %778 = vmatmul.mubr.bf16.gmra.mxu0 %v702
    %v779 = vpop.f32.mrf.mxu0
    %v780 = vadd.f32 0.0, %v779
    %v781 = vpop.f32.mrf.mxu0
    %v782 = vpop.f32.mrf.mxu0
    %v783 = vpop.f32.mrf.mxu0
    %784 = vdwg.mxu0
    %v788 = vcombine.low %v739, %v741
    %v789 = vcombine.high %v739, %v741
    %v790 = vcombine.high %v780, %v780
    %v794 = vadd.f32 %v628, %v788
    %v795 = vadd.f32 %v629, %v780
    %v796 = vadd.f32 %v630, %v789
    %v797 = vadd.f32 %v631, %v790
    %v798 = vld [vmem:[#allocation9 + $0xc0] sm:$0xff]
    %v799 = vld [vmem:[#allocation9 + $0xc8] sm:$0xf]
    %v800 = vld [vmem:[#allocation9 + $0xcc] sm:$0xff]
    %v801 = vld [vmem:[#allocation9 + $0xd4] sm:$0xf]
    %v802 = vld [vmem:[#allocation9 + $0xd8] sm:$0xff]
    %v803 = vld [vmem:[#allocation9 + $0xe0] sm:$0xf]
    %v804 = vld [vmem:[#allocation9 + $0xe4] sm:$0xff]
    %v805 = vld [vmem:[#allocation9 + $0xec] sm:$0xf]
    %v806 = vcombine.low %v170, %v178
    %v808 = vunpack.c.l.s4 1983009808
    %v809 = vunpack.c.0.s8 %v808
    %v810 = vlaneseq
    %v811 = vshrl.u32 %v810, 7
    %v812 = vsub.s32 %v809, %v811
    %v813 = vrot.slane %v806, %v812
    %v822 = vunpack.c.l.b16 %v798
    %v823 = vunpack.c.h.b16 %v798
    %v824 = vunpack.c.l.b16 %v799
    %v825 = vunpack.c.l.b16 %v800
    %v826 = vunpack.c.h.b16 %v800
    %v827 = vunpack.c.l.b16 %v801
    %v828 = vunpack.c.l.b16 %v802
    %v829 = vunpack.c.h.b16 %v802
    %v830 = vunpack.c.l.b16 %v803
    %v831 = vunpack.c.l.b16 %v804
    %v832 = vunpack.c.h.b16 %v804
    %v833 = vunpack.c.l.b16 %v805
    %v834 = vpack.c.b16 %v825, %v822
    %v835 = vpack.c.b16 %v826, %v823
    %v836 = vpack.c.b16 %v827, %v824
    %v837 = vpack.c.b16 %v831, %v828
    %v838 = vpack.c.b16 %v832, %v829
    %v839 = vpack.c.b16 %v833, %v830
    %v847 = vsel %vm254, %v813, 0
    %849 = vmatprep.subr.bf16.mxu0 0
    %850 = vmatpush1.bf16.msra.mxu0 0
    %851 = vmatprep.subr.bf16.mxu0 0
    %852 = vmatpush1.bf16.msra.mxu0 0
    %853 = vmatprep.subr.bf16.mxu0 0
    %854 = vmatpush1.bf16.msra.mxu0 0
    %855 = vmatprep.subr.bf16.mxu0 0
    %856 = vmatpush1.bf16.msra.mxu0 0
    %857 = vmatprep.subr.bf16.mxu0 0
    %858 = vmatpush1.bf16.msra.mxu0 0
    %859 = vmatprep.subr.bf16.mxu0 0
    %860 = vmatpush1.bf16.msra.mxu0 0
    %861 = vmatprep.subr.bf16.mxu0 %v838
    %862 = vmatpush1.bf16.msra.mxu0 %v837
    %863 = vmatprep.subr.bf16.mxu0 %v835
    %864 = vmatpush1.bf16.msra.mxu0 %v834
    %865 = vmatprep.subr.bf16.mxu0 0
    %866 = vmatpush2.bf16.msra.mxu0 0
    %867 = vmatprep.subr.bf16.mxu0 0
    %868 = vmatpush2.bf16.msra.mxu0 0
    %869 = vmatprep.subr.bf16.mxu0 0
    %870 = vmatpush2.bf16.msra.mxu0 0
    %871 = vmatprep.subr.bf16.mxu0 0
    %872 = vmatpush2.bf16.msra.mxu0 0
    %873 = vmatprep.subr.bf16.mxu0 0
    %874 = vmatpush2.bf16.msra.mxu0 0
    %875 = vmatprep.subr.bf16.mxu0 0
    %876 = vmatpush2.bf16.msra.mxu0 0
    %877 = vmatprep.subr.bf16.mxu0 0
    %878 = vmatpush2.bf16.msra.mxu0 0
    %879 = vmatprep.subr.bf16.mxu0 0
    %880 = vmatpush2.bf16.msra.mxu0 0
    %881 = vmatprep.mubr.bf16.mxu0 0
    %882 = vmatmul.mubr.bf16.gmra.mxu0 %v847
    %v883 = vpop.f32.mrf.mxu0
    %v884 = vadd.f32 0.0, %v883
    %v885 = vpop.f32.mrf.mxu0
    %v886 = vadd.f32 0.0, %v885
    %v887 = vpop.f32.mrf.mxu0
    %v888 = vpop.f32.mrf.mxu0
    %889 = vdwg.mxu0
    %890 = vmatprep.subr.bf16.mxu0 0
    %891 = vmatpush1.bf16.msra.mxu0 0
    %892 = vmatprep.subr.bf16.mxu0 0
    %893 = vmatpush1.bf16.msra.mxu0 0
    %894 = vmatprep.subr.bf16.mxu0 0
    %895 = vmatpush1.bf16.msra.mxu0 0
    %896 = vmatprep.subr.bf16.mxu0 0
    %897 = vmatpush1.bf16.msra.mxu0 0
    %898 = vmatprep.subr.bf16.mxu0 0
    %899 = vmatpush1.bf16.msra.mxu0 0
    %900 = vmatprep.subr.bf16.mxu0 0
    %901 = vmatpush1.bf16.msra.mxu0 0
    %902 = vmatprep.subr.bf16.mxu0 0
    %903 = vmatpush1.bf16.msra.mxu0 %v839
    %904 = vmatprep.subr.bf16.mxu0 0
    %905 = vmatpush1.bf16.msra.mxu0 %v836
    %906 = vmatprep.subr.bf16.mxu0 0
    %907 = vmatpush2.bf16.msra.mxu0 0
    %908 = vmatprep.subr.bf16.mxu0 0
    %909 = vmatpush2.bf16.msra.mxu0 0
    %910 = vmatprep.subr.bf16.mxu0 0
    %911 = vmatpush2.bf16.msra.mxu0 0
    %912 = vmatprep.subr.bf16.mxu0 0
    %913 = vmatpush2.bf16.msra.mxu0 0
    %914 = vmatprep.subr.bf16.mxu0 0
    %915 = vmatpush2.bf16.msra.mxu0 0
    %916 = vmatprep.subr.bf16.mxu0 0
    %917 = vmatpush2.bf16.msra.mxu0 0
    %918 = vmatprep.subr.bf16.mxu0 0
    %919 = vmatpush2.bf16.msra.mxu0 0
    %920 = vmatprep.subr.bf16.mxu0 0
    %921 = vmatpush2.bf16.msra.mxu0 0
    %922 = vmatprep.mubr.bf16.mxu0 0
    %923 = vmatmul.mubr.bf16.gmra.mxu0 %v847
    %v924 = vpop.f32.mrf.mxu0
    %v925 = vadd.f32 0.0, %v924
    %v926 = vpop.f32.mrf.mxu0
    %v927 = vpop.f32.mrf.mxu0
    %v928 = vpop.f32.mrf.mxu0
    %929 = vdwg.mxu0
    %v933 = vcombine.low %v884, %v886
    %v934 = vcombine.high %v884, %v886
    %v935 = vcombine.high %v925, %v925
    %v939 = vadd.f32 %v794, %v933
    %v940 = vadd.f32 %v795, %v925
    %v941 = vadd.f32 %v796, %v934
    %v942 = vadd.f32 %v797, %v935
    %v943 = vld [vmem:[%s3] sm:$0x7]
    %v945 = vlaneseq
    %v946 = vshrl.u32 %v945, 7
    %v947 = vsub.s32 0, %v946
    %v948 = vrot.slane %v943, %v947
    %v949 = vlaneseq
    %v950 = vshrl.u32 %v949, 7
    %v951 = vsub.s32 1, %v950
    %v952 = vrot.slane %v943, %v951
    %v953 = vlaneseq
    %v954 = vshrl.u32 %v953, 7
    %v955 = vsub.s32 2, %v954
    %v956 = vrot.slane %v943, %v955
    %v958 = vcombine.low %v948, %v952
    %v960 = vadd.f32 %v939, %v958
    %v961 = vadd.f32 %v940, %v956
    %v962 = vadd.f32 %v941, %v958
    %v963 = vadd.f32 %v942, %v956
    %v964 = vmax.f32 %v960, 0.0
    %v965 = vmax.f32 %v961, 0.0
    %v966 = vmax.f32 %v962, 0.0
    %v967 = vmax.f32 %v963, 0.0
    %v970 = vcombine.high %v964, %v964
    %v971 = vcombine.high %v966, %v966
    %vm974 = vcmask 1043456
    %v975 = vsel %vm974, %v964, -inf
    %v976 = vrot.slane %v975, 4
    %v977 = vmax.f32 %v975, %v976
    %v978 = vrot.slane %v977, 2
    %v979 = vmax.f32 %v977, %v978
    %v980 = vrot.slane %v979, 1
    %v981 = vmax.f32 %v979, %v980
    %v982 = vsel %vm974, %v970, -inf
    %v983 = vrot.slane %v982, 4
    %v984 = vmax.f32 %v982, %v983
    %v985 = vrot.slane %v984, 2
    %v986 = vmax.f32 %v984, %v985
    %v987 = vrot.slane %v986, 1
    %v988 = vmax.f32 %v986, %v987
    %v989 = vsel %vm974, %v965, -inf
    %v990 = vrot.slane %v989, 4
    %v991 = vmax.f32 %v989, %v990
    %v992 = vrot.slane %v991, 2
    %v993 = vmax.f32 %v991, %v992
    %v994 = vrot.slane %v993, 1
    %v995 = vmax.f32 %v993, %v994
    %v996 = vsel %vm974, %v966, -inf
    %v997 = vrot.slane %v996, 4
    %v998 = vmax.f32 %v996, %v997
    %v999 = vrot.slane %v998, 2
    %v1000 = vmax.f32 %v998, %v999
    %v1001 = vrot.slane %v1000, 1
    %v1002 = vmax.f32 %v1000, %v1001
    %v1003 = vsel %vm974, %v971, -inf
    %v1004 = vrot.slane %v1003, 4
    %v1005 = vmax.f32 %v1003, %v1004
    %v1006 = vrot.slane %v1005, 2
    %v1007 = vmax.f32 %v1005, %v1006
    %v1008 = vrot.slane %v1007, 1
    %v1009 = vmax.f32 %v1007, %v1008
    %v1010 = vsel %vm974, %v967, -inf
    %v1011 = vrot.slane %v1010, 4
    %v1012 = vmax.f32 %v1010, %v1011
    %v1013 = vrot.slane %v1012, 2
    %v1014 = vmax.f32 %v1012, %v1013
    %v1015 = vrot.slane %v1014, 1
    %v1016 = vmax.f32 %v1014, %v1015
    %v1017 = vld [vmem:[%s4] sm:$0x7]
    %v1018 = vld [vmem:[#allocation5] sm:$0x1]
    %1020 = vset.pattern.permute.xlu0 0
    %1021 = vperm.xlu0 %1020, %v1018
    %v1022 = vpop.permute.xlu0 %1021
    %v1024 = vlaneseq
    %v1025 = vshrl.u32 %v1024, 7
    %v1026 = vsub.s32 0, %v1025
    %v1027 = vrot.slane %v1022, %v1026
    %v1029 = vlaneseq
    %v1030 = vshrl.u32 %v1029, 7
    %v1031 = vsub.s32 0, %v1030
    %v1032 = vrot.slane %v1017, %v1031
    %v1033 = vlaneseq
    %v1034 = vshrl.u32 %v1033, 7
    %v1035 = vsub.s32 1, %v1034
    %v1036 = vrot.slane %v1017, %v1035
    %v1037 = vlaneseq
    %v1038 = vshrl.u32 %v1037, 7
    %v1039 = vsub.s32 2, %v1038
    %v1040 = vrot.slane %v1017, %v1039
    %vm1050 = vcmask 1041409
    %v1051 = vsel %vm1050, %v1002, %v981
    %v1052 = vsel %vm1050, %v1009, %v988
    %v1053 = vsel %vm1050, %v1016, %v995
    %1057 = vmatprep.subr.mxu0 0.0
    %1058 = vmatpush1.xpose.msra.mxu0 0.0
    %1059 = vmatprep.subr.mxu0 0.0
    %1060 = vmatpush1.xpose.msra.mxu0 0.0
    %1061 = vmatprep.subr.mxu0 0.0
    %1062 = vmatpush1.xpose.msra.mxu0 0.0
    %1063 = vmatprep.subr.mxu0 0.0
    %1064 = vmatpush1.xpose.msra.mxu0 0.0
    %1065 = vmatprep.subr.mxu0 0.0
    %1066 = vmatpush1.xpose.msra.mxu0 0.0
    %1067 = vmatprep.subr.mxu0 0.0
    %1068 = vmatpush1.xpose.msra.mxu0 0.0
    %1069 = vmatprep.subr.mxu0 0.0
    %1070 = vmatpush1.xpose.msra.mxu0 0.0
    %1071 = vmatprep.subr.mxu0 0.0
    %1072 = vmatpush1.xpose.msra.mxu0 0.0
    %1073 = vmatprep.subr.mxu0 0.0
    %1074 = vmatpush1.xpose.msra.mxu0 0.0
    %1075 = vmatprep.subr.mxu0 0.0
    %1076 = vmatpush1.xpose.msra.mxu0 0.0
    %1077 = vmatprep.subr.mxu0 0.0
    %1078 = vmatpush1.xpose.msra.mxu0 0.0
    %1079 = vmatprep.subr.mxu0 0.0
    %1080 = vmatpush1.xpose.msra.mxu0 0.0
    %1081 = vmatprep.subr.mxu0 0.0
    %1082 = vmatpush1.xpose.msra.mxu0 0.0
    %1083 = vmatprep.subr.mxu0 0.0
    %1084 = vmatpush1.xpose.msra.mxu0 0.0
    %1085 = vmatprep.subr.mxu0 0.0
    %1086 = vmatpush1.xpose.msra.mxu0 0.0
    %1087 = vmatprep.subr.mxu0 %v1052
    %1088 = vmatpush1.xpose.msra.mxu0 %v1051
    %1089 = vmatprep.subr.mxu0 0.0
    %1090 = vmatpush2.xpose.msra.mxu0 0.0
    %1091 = vmatprep.subr.mxu0 0.0
    %1092 = vmatpush2.xpose.msra.mxu0 0.0
    %1093 = vmatprep.subr.mxu0 0.0
    %1094 = vmatpush2.xpose.msra.mxu0 0.0
    %1095 = vmatprep.subr.mxu0 0.0
    %1096 = vmatpush2.xpose.msra.mxu0 0.0
    %1097 = vmatprep.subr.mxu0 0.0
    %1098 = vmatpush2.xpose.msra.mxu0 0.0
    %1099 = vmatprep.subr.mxu0 0.0
    %1100 = vmatpush2.xpose.msra.mxu0 0.0
    %1101 = vmatprep.subr.mxu0 0.0
    %1102 = vmatpush2.xpose.msra.mxu0 0.0
    %1103 = vmatprep.subr.mxu0 0.0
    %1104 = vmatpush2.xpose.msra.mxu0 0.0
    %1105 = vmatprep.subr.mxu0 0.0
    %1106 = vmatpush2.xpose.msra.mxu0 0.0
    %1107 = vmatprep.subr.mxu0 0.0
    %1108 = vmatpush2.xpose.msra.mxu0 0.0
    %1109 = vmatprep.subr.mxu0 0.0
    %1110 = vmatpush2.xpose.msra.mxu0 0.0
    %1111 = vmatprep.subr.mxu0 0.0
    %1112 = vmatpush2.xpose.msra.mxu0 0.0
    %1113 = vmatprep.subr.mxu0 0.0
    %1114 = vmatpush2.xpose.msra.mxu0 0.0
    %1115 = vmatprep.subr.mxu0 0.0
    %1116 = vmatpush2.xpose.msra.mxu0 0.0
    %1117 = vmatprep.subr.mxu0 0.0
    %1118 = vmatpush2.xpose.msra.mxu0 0.0
    %1119 = vmatprep.subr.mxu0 0.0
    %1120 = vmatpush2.xpose.msra.mxu0 0.0
    %1121 = vmatprep.mubr.f32.mxu0 %v1036
    %1122 = vmatmul.mubr.f32.gmra.mxu0 %v1032
    %v1123 = vpop.f32.mrf.mxu0
    %v1124 = vadd.f32 %v1027, %v1123
    %v1125 = vpop.f32.mrf.mxu0
    %1126 = vdwg.mxu0
    %1127 = vmatprep.subr.mxu0 0.0
    %1128 = vmatpush1.xpose.msra.mxu0 0.0
    %1129 = vmatprep.subr.mxu0 0.0
    %1130 = vmatpush1.xpose.msra.mxu0 0.0
    %1131 = vmatprep.subr.mxu0 0.0
    %1132 = vmatpush1.xpose.msra.mxu0 0.0
    %1133 = vmatprep.subr.mxu0 0.0
    %1134 = vmatpush1.xpose.msra.mxu0 0.0
    %1135 = vmatprep.subr.mxu0 0.0
    %1136 = vmatpush1.xpose.msra.mxu0 0.0
    %1137 = vmatprep.subr.mxu0 0.0
    %1138 = vmatpush1.xpose.msra.mxu0 0.0
    %1139 = vmatprep.subr.mxu0 0.0
    %1140 = vmatpush1.xpose.msra.mxu0 0.0
    %1141 = vmatprep.subr.mxu0 0.0
    %1142 = vmatpush1.xpose.msra.mxu0 0.0
    %1143 = vmatprep.subr.mxu0 0.0
    %1144 = vmatpush1.xpose.msra.mxu0 0.0
    %1145 = vmatprep.subr.mxu0 0.0
    %1146 = vmatpush1.xpose.msra.mxu0 0.0
    %1147 = vmatprep.subr.mxu0 0.0
    %1148 = vmatpush1.xpose.msra.mxu0 0.0
    %1149 = vmatprep.subr.mxu0 0.0
    %1150 = vmatpush1.xpose.msra.mxu0 0.0
    %1151 = vmatprep.subr.mxu0 0.0
    %1152 = vmatpush1.xpose.msra.mxu0 0.0
    %1153 = vmatprep.subr.mxu0 0.0
    %1154 = vmatpush1.xpose.msra.mxu0 0.0
    %1155 = vmatprep.subr.mxu0 0.0
    %1156 = vmatpush1.xpose.msra.mxu0 0.0
    %1157 = vmatprep.subr.mxu0 0.0
    %1158 = vmatpush1.xpose.msra.mxu0 %v1053
    %1159 = vmatprep.subr.mxu0 0.0
    %1160 = vmatpush2.xpose.msra.mxu0 0.0
    %1161 = vmatprep.subr.mxu0 0.0
    %1162 = vmatpush2.xpose.msra.mxu0 0.0
    %1163 = vmatprep.subr.mxu0 0.0
    %1164 = vmatpush2.xpose.msra.mxu0 0.0
    %1165 = vmatprep.subr.mxu0 0.0
    %1166 = vmatpush2.xpose.msra.mxu0 0.0
    %1167 = vmatprep.subr.mxu0 0.0
    %1168 = vmatpush2.xpose.msra.mxu0 0.0
    %1169 = vmatprep.subr.mxu0 0.0
    %1170 = vmatpush2.xpose.msra.mxu0 0.0
    %1171 = vmatprep.subr.mxu0 0.0
    %1172 = vmatpush2.xpose.msra.mxu0 0.0
    %1173 = vmatprep.subr.mxu0 0.0
    %1174 = vmatpush2.xpose.msra.mxu0 0.0
    %1175 = vmatprep.subr.mxu0 0.0
    %1176 = vmatpush2.xpose.msra.mxu0 0.0
    %1177 = vmatprep.subr.mxu0 0.0
    %1178 = vmatpush2.xpose.msra.mxu0 0.0
    %1179 = vmatprep.subr.mxu0 0.0
    %1180 = vmatpush2.xpose.msra.mxu0 0.0
    %1181 = vmatprep.subr.mxu0 0.0
    %1182 = vmatpush2.xpose.msra.mxu0 0.0
    %1183 = vmatprep.subr.mxu0 0.0
    %1184 = vmatpush2.xpose.msra.mxu0 0.0
    %1185 = vmatprep.subr.mxu0 0.0
    %1186 = vmatpush2.xpose.msra.mxu0 0.0
    %1187 = vmatprep.subr.mxu0 0.0
    %1188 = vmatpush2.xpose.msra.mxu0 0.0
    %1189 = vmatprep.subr.mxu0 0.0
    %1190 = vmatpush2.xpose.msra.mxu0 0.0
    %1191 = vmatprep.mubr.f32.mxu0 0.0
    %1192 = vmatmul.mubr.f32.gmra.mxu0 %v1040
    %v1193 = vpop.f32.mrf.mxu0
    %v1194 = vadd.f32 %v1124, %v1193
    %v1195 = vpop.f32.mrf.mxu0
    %1196 = vdwg.mxu0
    %vm1197 = vcmask 8192
    %1198 = vst.msk [vmem:[#allocation11] sm:$0x1] %vm1197, %v1194
    // Predicated region
    $region30: #{tpu_custom_call.1} parent=1 // pred_check
      _
    $region31: #{tpu_custom_call.1} parent=1 // pred_check_branch
      %1200 = sbr.rel (0) target = $region33
    $region32: #{tpu_custom_call.1} parent=1 // pred_region
      %s1202 = ssub.s32 16, 16
      %1203 = vsyncadd [#allocation8], %s1202
      %s1205 = sshll.u32 [#allocation11], 4
      %s1206 = int_to_ptr.vmem [resolvable:$true] %s1205
      %1208 = dma.vmem_to_hbm [thread:$0]  %s1206, 16, %s6, [#allocation8]
    $region33: #{tpu_custom_call.1} parent=1 // pred_fallthru
      _
    // Predicated region
    $region34: #{tpu_custom_call.1} parent=1 // pred_check
      _
    $region35: #{tpu_custom_call.1} parent=1 // pred_check_branch
      %1210 = sbr.rel (0) target = $region37
    $region36: #{tpu_custom_call.1} parent=1 // pred_region
      %1211 = dma.done [#allocation8], 16
    $region37: #{tpu_custom_call.1} parent=1 // pred_fallthru
      _
    %1212 = vsyncpa [#allocation7], 1
    %1213 = vsyncpa [#allocation10], 1
    %1214 = vsyncpa [#allocation8], 1

</llo_original>
